<compile_context>
chip_gen: v5e
topology: v5e:2x2
jax: 0.10.0
libtpu: 0.0.40
codegen_flags: <defaults>
</compile_context>

<pallas_src>
import functools

import jax
import jax.numpy as jnp
from jax import lax
from jax.experimental import pallas as pl
from jax.experimental.pallas import tpu as pltpu

# ----------------------------- configuration -------------------------------
ACIDS = "*ACDEFGHIKLMNPQRSTVWY"   # pad token '*' at index 0, 20 amino acids
VOCAB_SIZE = len(ACIDS)           # 21
EMB_SIZE = 32
PEPTIDE_PAD = 3
PADDING_IDX = 0
MHC_LEN = 34


def _embed_kernel(pep_g_ref, mhc_g_ref, pep_tbl_ref, mhc_tbl_ref,
                  pep_out_ref, mhc_out_ref, *, V, PACK):
    """One batch tile: two independent packed one-hot embedding lookups.

    pep_g_ref   : (GP, PACK)        int32  PACK peptide tokens per row
    mhc_g_ref   : (GM, PACK)        int32  PACK MHC tokens per row
    pep_tbl_ref : (PACK*V, PACK*E)  block-diagonal peptide table (resident)
    mhc_tbl_ref : (PACK*V, PACK*E)  block-diagonal MHC table (resident)
    pep_out_ref : (GP, PACK*E)      f32    lane-dense packed peptide embs
    mhc_out_ref : (GM, PACK*E)      f32    lane-dense packed MHC embs
    """

    def packed_lookup(ids_ref, tbl_ref, out_ref):
        G = ids_ref.shape[0]
        K = PACK * V                                   # 84 -> single lane-tile
        ids = ids_ref[...]                             # (G, PACK)
        col = lax.broadcasted_iota(jnp.int32, (G, K), 1)
        # OR-combine boolean compares; one cast at the end (slot column
        # ranges [s*V,(s+1)*V) are disjoint, so OR gives the exact one-hot).
        hit = col == ids[:, 0:1]
        for s in range(1, PACK):                       # static unroll
            hit = hit | (col == (ids[:, s:s + 1] + s * V))
        onehot = hit.astype(tbl_ref.dtype)
        # Single MXU matmul -> (G, PACK*E) lane-dense slab, f32 accumulate.
        out_ref[...] = jnp.dot(onehot, tbl_ref[...],
                               preferred_element_type=jnp.float32)

    packed_lookup(pep_g_ref, pep_tbl_ref, pep_out_ref)
    packed_lookup(mhc_g_ref, mhc_tbl_ref, mhc_out_ref)


def network_forward(peptide_x, mhc_x, peptide_emb_w, mhc_emb_w,
                    *, peptide_pad=PEPTIDE_PAD, padding_idx=PADDING_IDX,
                    batch_tile=None, compute_dtype=jnp.float32):
    B, Lp = peptide_x.shape
    _, Lm = mhc_x.shape
    V, E = peptide_emb_w.shape

    # Padding mask: trivially-fused elementwise XLA; keeping it out of the
    # kernel removes a lane-sparse input stream and an 8-lane masked store.
    masks = peptide_x[:, peptide_pad:Lp - peptide_pad] != padding_idx

    # How many tokens fit in one 128-lane output row.
    PACK = 128 // E if (E <= 128 and 128 % E == 0) else 1

    # Batch tile: multiple of 32 keeps packed row counts sublane-aligned for
    # any Lp/Lm.  TB=512 for large B (~15 MiB/step incl. double buffers ->
    # fits v5e/v6e 128 MiB and v7x 64 MiB VMEM); mid-size batches are split
    # into >=2 tiles so v7x can shard the parallel axis across both cores.
    if batch_tile is None:
        Bp32 = ((B + 31) // 32) * 32
        if Bp32 >= 1024:
            batch_tile = 512
        elif Bp32 >= 64:
            batch_tile = (((Bp32 // 2) + 31) // 32) * 32
        else:
            batch_tile = Bp32
    TB = batch_tile
    assert TB % 32 == 0, "batch_tile must be a multiple of 32"
    assert (TB * Lp) % PACK == 0 and (TB * Lm) % PACK == 0
    Bp = ((B + TB - 1) // TB) * TB
    n_tiles = Bp // TB

    pep = peptide_x if peptide_x.dtype == jnp.int32 else peptide_x.astype(jnp.int32)
    mhc = mhc_x if mhc_x.dtype == jnp.int32 else mhc_x.astype(jnp.int32)
    if Bp != B:
        pep = jnp.pad(pep, ((0, Bp - B), (0, 0)))
        mhc = jnp.pad(mhc, ((0, Bp - B), (0, 0)))

    # Grouped (PACK tokens / row) id streams: free row-major reshapes in HBM.
    pep_g = pep.reshape(Bp * Lp // PACK, PACK)
    mhc_g = mhc.reshape(Bp * Lm // PACK, PACK)

    # Per-stream block-diagonal tables: slot s holds W at rows [s*V,(s+1)*V),
    # cols [s*E,(s+1)*E).  K = PACK*V = 84 -> one lane-tile per row.
    eye = jnp.eye(PACK, dtype=compute_dtype)
    pep_tbl = jnp.kron(eye, peptide_emb_w.astype(compute_dtype))   # (PACK*V, PACK*E)
    mhc_tbl = jnp.kron(eye, mhc_emb_w.astype(compute_dtype))
    K = PACK * V

    GP = TB * Lp // PACK          # packed peptide rows per tile (multiple of 8)
    GM = TB * Lm // PACK          # packed MHC rows per tile (multiple of 8)

    kernel = functools.partial(_embed_kernel, V=V, PACK=PACK)

    pep_slab, mhc_slab = pl.pallas_call(
        kernel,
        grid=(n_tiles,),
        in_specs=[
            pl.BlockSpec((GP, PACK), lambda i: (i, 0)),        # grouped peptide ids
            pl.BlockSpec((GM, PACK), lambda i: (i, 0)),        # grouped MHC ids
            pl.BlockSpec((K, PACK * E), lambda i: (0, 0)),     # resident peptide table
            pl.BlockSpec((K, PACK * E), lambda i: (0, 0)),     # resident MHC table
        ],
        out_specs=[
            pl.BlockSpec((GP, PACK * E), lambda i: (i, 0)),
            pl.BlockSpec((GM, PACK * E), lambda i: (i, 0)),
        ],
        out_shape=(
            jax.ShapeDtypeStruct((Bp * Lp // PACK, PACK * E), jnp.float32),
            jax.ShapeDtypeStruct((Bp * Lm // PACK, PACK * E), jnp.float32),
        ),
        compiler_params=pltpu.CompilerParams(
            dimension_semantics=("parallel",),
            vmem_limit_bytes=32 * 1024 * 1024),
    )(pep_g, mhc_g, pep_tbl, mhc_tbl)

    # Packed slab -> (B, L, E): row-major, so this reshape is a free bitcast.
    pep_out = pep_slab.reshape(Bp, Lp, E)[:B]
    mhc_out = mhc_slab.reshape(Bp, Lm, E)[:B]
    return pep_out, mhc_out, masks


if __name__ == "__main__":
    key = jax.random.PRNGKey(0)
    k_pw, k_mw, k_pi, k_mi = jax.random.split(key, 4)

    # Deterministic parameter init, matching reset_parameters: U(-0.1, 0.1)
    peptide_emb_w = jax.random.uniform(
        k_pw, (VOCAB_SIZE, EMB_SIZE), jnp.float32, minval=-0.1, maxval=0.1)
    mhc_emb_w = jax.random.uniform(
        k_mw, (VOCAB_SIZE, EMB_SIZE), jnp.float32, minval=-0.1, maxval=0.1)

    # Small example inputs: batch=2, peptide length 14 (pad=3 each side -> 8 core), mhc_len=34
    B, Lp = 2, 14
    peptide_x = jax.random.randint(k_pi, (B, Lp), 0, VOCAB_SIZE, jnp.int32)
    # zero out the flanking pad positions like real peptide encoding would
    peptide_x = peptide_x.at[:, :PEPTIDE_PAD].set(0)
    peptide_x = peptide_x.at[:, Lp - PEPTIDE_PAD:].set(0)
    mhc_x = jax.random.randint(k_mi, (B, MHC_LEN), 1, VOCAB_SIZE, jnp.int32)

    fwd = jax.jit(network_forward)
    pep_out, mhc_out, mask = fwd(peptide_x, mhc_x, peptide_emb_w, mhc_emb_w)
    jax.block_until_ready((pep_out, mhc_out, mask))

    # Pure-JAX reference check (embedding = table gather).
    ref_pep = jnp.take(peptide_emb_w, peptide_x, axis=0)
    ref_mhc = jnp.take(mhc_emb_w, mhc_x, axis=0)
    ref_mask = peptide_x[:, PEPTIDE_PAD:Lp - PEPTIDE_PAD] != PADDING_IDX
    assert pep_out.shape == (B, Lp, EMB_SIZE)
    assert mhc_out.shape == (B, MHC_LEN, EMB_SIZE)
    assert mask.shape == (B, Lp - 2 * PEPTIDE_PAD)
    assert mask.dtype == jnp.bool_
    assert jnp.allclose(pep_out, ref_pep, atol=1e-6)
    assert jnp.allclose(mhc_out, ref_mhc, atol=1e-6)
    assert jnp.array_equal(mask, ref_mask)

    print("KERNEL_OK")
</pallas_src>

<mosaic_0001>
module attributes {stable_mosaic.version = 11 : i64} {
  func.func @_embed_kernel(%arg0: i32, %arg1: memref<112x4xi32, #tpu.memory_space<vmem>>, %arg2: memref<272x4xi32, #tpu.memory_space<vmem>>, %arg3: memref<84x128xf32, #tpu.memory_space<vmem>>, %arg4: memref<84x128xf32, #tpu.memory_space<vmem>>, %arg5: memref<112x128xf32, #tpu.memory_space<vmem>>, %arg6: memref<272x128xf32, #tpu.memory_space<vmem>>) attributes {dimension_semantics = [#tpu.dimension_semantics<parallel>], iteration_bounds = array<i64: 1>, scalar_prefetch = 0 : i64, scratch_operands = 0 : i64, tpu.core_type = #tpu.core_type<tc>, window_params = [{transform_indices = @transform_0, window_bounds = array<i64: 112, 4>}, {transform_indices = @transform_1, window_bounds = array<i64: 272, 4>}, {pipeline_mode = #tpu.pipeline_mode<synchronous>, transform_indices = @transform_2, window_bounds = array<i64: 84, 128>}, {pipeline_mode = #tpu.pipeline_mode<synchronous>, transform_indices = @transform_3, window_bounds = array<i64: 84, 128>}, {transform_indices = @transform_4, window_bounds = array<i64: 112, 128>}, {transform_indices = @transform_5, window_bounds = array<i64: 272, 128>}]} {
    %c0 = arith.constant 0 : index
    %c0_0 = arith.constant 0 : index
    %0 = vector.load %arg1[%c0, %c0_0] : memref<112x4xi32, #tpu.memory_space<vmem>>, vector<112x4xi32>
    %1 = tpu.iota {dimensions = array<i32: 1>} : vector<112x84xi32>
    %2 = vector.extract_strided_slice %0 {offsets = [0, 0], sizes = [112, 1], strides = [1, 1]} : vector<112x4xi32> to vector<112x1xi32>
    %3 = vector.broadcast %2 : vector<112x1xi32> to vector<112x84xi32>
    %4 = arith.cmpi eq, %1, %3 : vector<112x84xi32>
    %5 = vector.extract_strided_slice %0 {offsets = [0, 1], sizes = [112, 1], strides = [1, 1]} : vector<112x4xi32> to vector<112x1xi32>
    %c21_i32 = arith.constant 21 : i32
    %6 = vector.broadcast %c21_i32 : i32 to vector<112x1xi32>
    %7 = arith.addi %5, %6 : vector<112x1xi32>
    %8 = vector.broadcast %7 : vector<112x1xi32> to vector<112x84xi32>
    %9 = arith.cmpi eq, %1, %8 : vector<112x84xi32>
    %10 = arith.ori %4, %9 : vector<112x84xi1>
    %11 = vector.extract_strided_slice %0 {offsets = [0, 2], sizes = [112, 1], strides = [1, 1]} : vector<112x4xi32> to vector<112x1xi32>
    %c42_i32 = arith.constant 42 : i32
    %12 = vector.broadcast %c42_i32 : i32 to vector<112x1xi32>
    %13 = arith.addi %11, %12 : vector<112x1xi32>
    %14 = vector.broadcast %13 : vector<112x1xi32> to vector<112x84xi32>
    %15 = arith.cmpi eq, %1, %14 : vector<112x84xi32>
    %16 = arith.ori %10, %15 : vector<112x84xi1>
    %17 = vector.extract_strided_slice %0 {offsets = [0, 3], sizes = [112, 1], strides = [1, 1]} : vector<112x4xi32> to vector<112x1xi32>
    %c63_i32 = arith.constant 63 : i32
    %18 = vector.broadcast %c63_i32 : i32 to vector<112x1xi32>
    %19 = arith.addi %17, %18 : vector<112x1xi32>
    %20 = vector.broadcast %19 : vector<112x1xi32> to vector<112x84xi32>
    %21 = arith.cmpi eq, %1, %20 : vector<112x84xi32>
    %22 = arith.ori %16, %21 : vector<112x84xi1>
    %23 = arith.extui %22 : vector<112x84xi1> to vector<112x84xi32>
    %24 = arith.sitofp %23 : vector<112x84xi32> to vector<112x84xf32>
    %c0_1 = arith.constant 0 : index
    %c0_2 = arith.constant 0 : index
    %25 = vector.load %arg3[%c0_1, %c0_2] : memref<84x128xf32, #tpu.memory_space<vmem>>, vector<84x128xf32>
    %cst = arith.constant dense<0.000000e+00> : vector<112x128xf32>
    %26 = tpu.matmul %24, %25, %cst {dimension_numbers = #tpu.dot_dimension_numbers<[1], [0], [0], [1], [0, 0, 1, 1], [], []>} : vector<112x84xf32>, vector<84x128xf32>, vector<112x128xf32> -> vector<112x128xf32>
    %c0_3 = arith.constant 0 : index
    %c0_4 = arith.constant 0 : index
    %27 = vector.load %arg5[%c0_3, %c0_4] : memref<112x128xf32, #tpu.memory_space<vmem>>, vector<112x128xf32>
    tpu.vector_store %arg5[%c0_3, %c0_4], %26 {strides = array<i32>} : memref<112x128xf32, #tpu.memory_space<vmem>>, vector<112x128xf32>,
    %c0_5 = arith.constant 0 : index
    %c0_6 = arith.constant 0 : index
    %28 = vector.load %arg2[%c0_5, %c0_6] : memref<272x4xi32, #tpu.memory_space<vmem>>, vector<272x4xi32>
    %29 = tpu.iota {dimensions = array<i32: 1>} : vector<272x84xi32>
    %30 = vector.extract_strided_slice %28 {offsets = [0, 0], sizes = [272, 1], strides = [1, 1]} : vector<272x4xi32> to vector<272x1xi32>
    %31 = vector.broadcast %30 : vector<272x1xi32> to vector<272x84xi32>
    %32 = arith.cmpi eq, %29, %31 : vector<272x84xi32>
    %33 = vector.extract_strided_slice %28 {offsets = [0, 1], sizes = [272, 1], strides = [1, 1]} : vector<272x4xi32> to vector<272x1xi32>
    %c21_i32_7 = arith.constant 21 : i32
    %34 = vector.broadcast %c21_i32_7 : i32 to vector<272x1xi32>
    %35 = arith.addi %33, %34 : vector<272x1xi32>
    %36 = vector.broadcast %35 : vector<272x1xi32> to vector<272x84xi32>
    %37 = arith.cmpi eq, %29, %36 : vector<272x84xi32>
    %38 = arith.ori %32, %37 : vector<272x84xi1>
    %39 = vector.extract_strided_slice %28 {offsets = [0, 2], sizes = [272, 1], strides = [1, 1]} : vector<272x4xi32> to vector<272x1xi32>
    %c42_i32_8 = arith.constant 42 : i32
    %40 = vector.broadcast %c42_i32_8 : i32 to vector<272x1xi32>
    %41 = arith.addi %39, %40 : vector<272x1xi32>
    %42 = vector.broadcast %41 : vector<272x1xi32> to vector<272x84xi32>
    %43 = arith.cmpi eq, %29, %42 : vector<272x84xi32>
    %44 = arith.ori %38, %43 : vector<272x84xi1>
    %45 = vector.extract_strided_slice %28 {offsets = [0, 3], sizes = [272, 1], strides = [1, 1]} : vector<272x4xi32> to vector<272x1xi32>
    %c63_i32_9 = arith.constant 63 : i32
    %46 = vector.broadcast %c63_i32_9 : i32 to vector<272x1xi32>
    %47 = arith.addi %45, %46 : vector<272x1xi32>
    %48 = vector.broadcast %47 : vector<272x1xi32> to vector<272x84xi32>
    %49 = arith.cmpi eq, %29, %48 : vector<272x84xi32>
    %50 = arith.ori %44, %49 : vector<272x84xi1>
    %51 = arith.extui %50 : vector<272x84xi1> to vector<272x84xi32>
    %52 = arith.sitofp %51 : vector<272x84xi32> to vector<272x84xf32>
    %c0_10 = arith.constant 0 : index
    %c0_11 = arith.constant 0 : index
    %53 = vector.load %arg4[%c0_10, %c0_11] : memref<84x128xf32, #tpu.memory_space<vmem>>, vector<84x128xf32>
    %cst_12 = arith.constant dense<0.000000e+00> : vector<272x128xf32>
    %54 = tpu.matmul %52, %53, %cst_12 {dimension_numbers = #tpu.dot_dimension_numbers<[1], [0], [0], [1], [0, 0, 1, 1], [], []>} : vector<272x84xf32>, vector<84x128xf32>, vector<272x128xf32> -> vector<272x128xf32>
    %c0_13 = arith.constant 0 : index
    %c0_14 = arith.constant 0 : index
    %55 = vector.load %arg6[%c0_13, %c0_14] : memref<272x128xf32, #tpu.memory_space<vmem>>, vector<272x128xf32>
    tpu.vector_store %arg6[%c0_13, %c0_14], %54 {strides = array<i32>} : memref<272x128xf32, #tpu.memory_space<vmem>>, vector<272x128xf32>,
    return
  }
  func.func @transform_0(%arg0: i32) -> (i32, i32) {
    %c0_i32 = arith.constant 0 : i32
    %c0_i32_0 = arith.constant 0 : i32
    return %arg0, %c0_i32 : i32, i32
  }
  func.func @transform_1(%arg0: i32) -> (i32, i32) {
    %c0_i32 = arith.constant 0 : i32
    %c0_i32_0 = arith.constant 0 : i32
    return %arg0, %c0_i32 : i32, i32
  }
  func.func @transform_2(%arg0: i32) -> (i32, i32) {
    %c0_i32 = arith.constant 0 : i32
    %c0_i32_0 = arith.constant 0 : i32
    %c0_i32_1 = arith.constant 0 : i32
    return %c0_i32, %c0_i32_0 : i32, i32
  }
  func.func @transform_3(%arg0: i32) -> (i32, i32) {
    %c0_i32 = arith.constant 0 : i32
    %c0_i32_0 = arith.constant 0 : i32
    %c0_i32_1 = arith.constant 0 : i32
    return %c0_i32, %c0_i32_0 : i32, i32
  }
  func.func @transform_4(%arg0: i32) -> (i32, i32) {
    %c0_i32 = arith.constant 0 : i32
    %c0_i32_0 = arith.constant 0 : i32
    return %arg0, %c0_i32 : i32, i32
  }
  func.func @transform_5(%arg0: i32) -> (i32, i32) {
    %c0_i32 = arith.constant 0 : i32
    %c0_i32_0 = arith.constant 0 : i32
    return %arg0, %c0_i32 : i32, i32
  }
}

</mosaic_0001>

<llo_original>
// kernel: network_forward.1
$region0: #{network_forward.1}
  #allocation0 [shape = 'u32[]', space=smem, size = 0x4, offset = 0x4, fixed_abs, tag = 'smem constant byte address 0x4 - core index']
  #allocation1 [shape = 'u32[72,128]{1,0:T(1,128)}', space=vmem, size = 0x9000, scoped, tag = 'internal scratch']
  %s0 = inlined_call_operand.vmem [shape: s32[112,4], index: 0, kind: input, shape index: {}]
  %s1 = inlined_call_operand.vmem [shape: s32[272,4], index: 1, kind: input, shape index: {}]
  %s2 = inlined_call_operand.vmem [shape: f32[84,128], index: 2, kind: input, shape index: {}]
  %s3 = inlined_call_operand.vmem [shape: f32[84,128], index: 3, kind: input, shape index: {}]
  %s4 = inlined_call_operand.vmem [shape: f32[112,128], index: 4, kind: output, shape index: {0}]
  %s5 = inlined_call_operand.vmem [shape: f32[272,128], index: 5, kind: output, shape index: {1}]
  %6 = xla_tuple %s4, %s5
  %s7 = sld [smem:[#allocation0]]
  $region34: #{network_forward.1} parent=0
    _
  %s9 = ssub.s32 1, %s7
  %s10 = scalar_select 0, %s9, %s7
  // Predicated region
  $region2: #{network_forward.1} parent=0 // pred_check
    _
  $region3: #{network_forward.1} parent=0 // pred_check_branch
    %12 = sbr.rel (0) target = $region5
  $region4: #{network_forward.1} parent=0 // pred_region
    _
  $region5: #{network_forward.1} parent=0 // pred_fallthru
    _
  // Predicated region
  $region6: #{network_forward.1} parent=0 // pred_check
    _
  $region7: #{network_forward.1} parent=0 // pred_check_branch
    %14 = sbr.rel (0) target = $region9
  $region8: #{network_forward.1} parent=0 // pred_region
    _
  $region9: #{network_forward.1} parent=0 // pred_fallthru
    _
  // Predicated region
  $region10: #{network_forward.1} parent=0 // pred_check
    _
  $region11: #{network_forward.1} parent=0 // pred_check_branch
    %16 = sbr.rel (0) target = $region13
  $region12: #{network_forward.1} parent=0 // pred_region
    _
  $region13: #{network_forward.1} parent=0 // pred_fallthru
    _
  // Predicated region
  $region14: #{network_forward.1} parent=0 // pred_check
    _
  $region15: #{network_forward.1} parent=0 // pred_check_branch
    %18 = sbr.rel (0) target = $region17
  $region16: #{network_forward.1} parent=0 // pred_region
    _
  $region17: #{network_forward.1} parent=0 // pred_fallthru
    _
  %v19 = vld [vmem:[%s0] sm:$0xff]
  %v20 = vld [vmem:[%s0 + $0x8] sm:$0xff]
  %v21 = vld [vmem:[%s0 + $0x10] sm:$0xff]
  %v22 = vld [vmem:[%s0 + $0x18] sm:$0xff]
  %v23 = vld [vmem:[%s0 + $0x20] sm:$0xff]
  %v24 = vld [vmem:[%s0 + $0x28] sm:$0xff]
  %v25 = vld [vmem:[%s0 + $0x30] sm:$0xff]
  %v26 = vld [vmem:[%s0 + $0x38] sm:$0xff]
  %v27 = vld [vmem:[%s0 + $0x40] sm:$0xff]
  %v28 = vld [vmem:[%s0 + $0x48] sm:$0xff]
  %v29 = vld [vmem:[%s0 + $0x50] sm:$0xff]
  %v30 = vld [vmem:[%s0 + $0x58] sm:$0xff]
  %v31 = vld [vmem:[%s0 + $0x60] sm:$0xff]
  %v32 = vld [vmem:[%s0 + $0x68] sm:$0xff]
  %v33 = vlaneseq
  %v34 = vand.u32 %v33, 127
  %35 = vset.pattern.permute.xlu0 0
  %36 = vperm.xlu0 %35, %v19
  %v37 = vpop.permute.xlu0 %36
  %38 = vset.pattern.permute.xlu0 0
  %39 = vperm.xlu0 %38, %v20
  %v40 = vpop.permute.xlu0 %39
  %41 = vset.pattern.permute.xlu0 0
  %42 = vperm.xlu0 %41, %v21
  %v43 = vpop.permute.xlu0 %42
  %44 = vset.pattern.permute.xlu0 0
  %45 = vperm.xlu0 %44, %v22
  %v46 = vpop.permute.xlu0 %45
  %47 = vset.pattern.permute.xlu0 0
  %48 = vperm.xlu0 %47, %v23
  %v49 = vpop.permute.xlu0 %48
  %50 = vset.pattern.permute.xlu0 0
  %51 = vperm.xlu0 %50, %v24
  %v52 = vpop.permute.xlu0 %51
  %53 = vset.pattern.permute.xlu0 0
  %54 = vperm.xlu0 %53, %v25
  %v55 = vpop.permute.xlu0 %54
  %56 = vset.pattern.permute.xlu0 0
  %57 = vperm.xlu0 %56, %v26
  %v58 = vpop.permute.xlu0 %57
  %59 = vset.pattern.permute.xlu0 0
  %60 = vperm.xlu0 %59, %v27
  %v61 = vpop.permute.xlu0 %60
  %62 = vset.pattern.permute.xlu0 0
  %63 = vperm.xlu0 %62, %v28
  %v64 = vpop.permute.xlu0 %63
  %65 = vset.pattern.permute.xlu0 0
  %66 = vperm.xlu0 %65, %v29
  %v67 = vpop.permute.xlu0 %66
  %68 = vset.pattern.permute.xlu0 0
  %69 = vperm.xlu0 %68, %v30
  %v70 = vpop.permute.xlu0 %69
  %71 = vset.pattern.permute.xlu0 0
  %72 = vperm.xlu0 %71, %v31
  %v73 = vpop.permute.xlu0 %72
  %74 = vset.pattern.permute.xlu0 0
  %75 = vperm.xlu0 %74, %v32
  %v76 = vpop.permute.xlu0 %75
  %vm77 = vcmp.eq.s32.totalorder %v34, %v37
  %vm78 = vcmp.eq.s32.totalorder %v34, %v40
  %vm79 = vcmp.eq.s32.totalorder %v34, %v43
  %vm80 = vcmp.eq.s32.totalorder %v34, %v46
  %vm81 = vcmp.eq.s32.totalorder %v34, %v49
  %vm82 = vcmp.eq.s32.totalorder %v34, %v52
  %vm83 = vcmp.eq.s32.totalorder %v34, %v55
  %vm84 = vcmp.eq.s32.totalorder %v34, %v58
  %vm85 = vcmp.eq.s32.totalorder %v34, %v61
  %vm86 = vcmp.eq.s32.totalorder %v34, %v64
  %vm87 = vcmp.eq.s32.totalorder %v34, %v67
  %vm88 = vcmp.eq.s32.totalorder %v34, %v70
  %vm89 = vcmp.eq.s32.totalorder %v34, %v73
  %vm90 = vcmp.eq.s32.totalorder %v34, %v76
  %v91 = vadd.s32 %v19, 21
  %v92 = vadd.s32 %v20, 21
  %v93 = vadd.s32 %v21, 21
  %v94 = vadd.s32 %v22, 21
  %v95 = vadd.s32 %v23, 21
  %v96 = vadd.s32 %v24, 21
  %v97 = vadd.s32 %v25, 21
  %v98 = vadd.s32 %v26, 21
  %v99 = vadd.s32 %v27, 21
  %v100 = vadd.s32 %v28, 21
  %v101 = vadd.s32 %v29, 21
  %v102 = vadd.s32 %v30, 21
  %v103 = vadd.s32 %v31, 21
  %v104 = vadd.s32 %v32, 21
  %105 = vset.pattern.permute.xlu0 1
  %106 = vperm.xlu0 %105, %v91
  %v107 = vpop.permute.xlu0 %106
  %108 = vset.pattern.permute.xlu0 1
  %109 = vperm.xlu0 %108, %v92
  %v110 = vpop.permute.xlu0 %109
  %111 = vset.pattern.permute.xlu0 1
  %112 = vperm.xlu0 %111, %v93
  %v113 = vpop.permute.xlu0 %112
  %114 = vset.pattern.permute.xlu0 1
  %115 = vperm.xlu0 %114, %v94
  %v116 = vpop.permute.xlu0 %115
  %117 = vset.pattern.permute.xlu0 1
  %118 = vperm.xlu0 %117, %v95
  %v119 = vpop.permute.xlu0 %118
  %120 = vset.pattern.permute.xlu0 1
  %121 = vperm.xlu0 %120, %v96
  %v122 = vpop.permute.xlu0 %121
  %123 = vset.pattern.permute.xlu0 1
  %124 = vperm.xlu0 %123, %v97
  %v125 = vpop.permute.xlu0 %124
  %126 = vset.pattern.permute.xlu0 1
  %127 = vperm.xlu0 %126, %v98
  %v128 = vpop.permute.xlu0 %127
  %129 = vset.pattern.permute.xlu0 1
  %130 = vperm.xlu0 %129, %v99
  %v131 = vpop.permute.xlu0 %130
  %132 = vset.pattern.permute.xlu0 1
  %133 = vperm.xlu0 %132, %v100
  %v134 = vpop.permute.xlu0 %133
  %135 = vset.pattern.permute.xlu0 1
  %136 = vperm.xlu0 %135, %v101
  %v137 = vpop.permute.xlu0 %136
  %138 = vset.pattern.permute.xlu0 1
  %139 = vperm.xlu0 %138, %v102
  %v140 = vpop.permute.xlu0 %139
  %141 = vset.pattern.permute.xlu0 1
  %142 = vperm.xlu0 %141, %v103
  %v143 = vpop.permute.xlu0 %142
  %144 = vset.pattern.permute.xlu0 1
  %145 = vperm.xlu0 %144, %v104
  %v146 = vpop.permute.xlu0 %145
  %vm147 = vcmp.eq.s32.totalorder %v34, %v107
  %vm148 = vcmp.eq.s32.totalorder %v34, %v110
  %vm149 = vcmp.eq.s32.totalorder %v34, %v113
  %vm150 = vcmp.eq.s32.totalorder %v34, %v116
  %vm151 = vcmp.eq.s32.totalorder %v34, %v119
  %vm152 = vcmp.eq.s32.totalorder %v34, %v122
  %vm153 = vcmp.eq.s32.totalorder %v34, %v125
  %vm154 = vcmp.eq.s32.totalorder %v34, %v128
  %vm155 = vcmp.eq.s32.totalorder %v34, %v131
  %vm156 = vcmp.eq.s32.totalorder %v34, %v134
  %vm157 = vcmp.eq.s32.totalorder %v34, %v137
  %vm158 = vcmp.eq.s32.totalorder %v34, %v140
  %vm159 = vcmp.eq.s32.totalorder %v34, %v143
  %vm160 = vcmp.eq.s32.totalorder %v34, %v146
  %vm161 = vmor %vm77, %vm147
  %vm162 = vmor %vm78, %vm148
  %vm163 = vmor %vm79, %vm149
  %vm164 = vmor %vm80, %vm150
  %vm165 = vmor %vm81, %vm151
  %vm166 = vmor %vm82, %vm152
  %vm167 = vmor %vm83, %vm153
  %vm168 = vmor %vm84, %vm154
  %vm169 = vmor %vm85, %vm155
  %vm170 = vmor %vm86, %vm156
  %vm171 = vmor %vm87, %vm157
  %vm172 = vmor %vm88, %vm158
  %vm173 = vmor %vm89, %vm159
  %vm174 = vmor %vm90, %vm160
  %v175 = vadd.s32 %v19, 42
  %v176 = vadd.s32 %v20, 42
  %v177 = vadd.s32 %v21, 42
  %v178 = vadd.s32 %v22, 42
  %v179 = vadd.s32 %v23, 42
  %v180 = vadd.s32 %v24, 42
  %v181 = vadd.s32 %v25, 42
  %v182 = vadd.s32 %v26, 42
  %v183 = vadd.s32 %v27, 42
  %v184 = vadd.s32 %v28, 42
  %v185 = vadd.s32 %v29, 42
  %v186 = vadd.s32 %v30, 42
  %v187 = vadd.s32 %v31, 42
  %v188 = vadd.s32 %v32, 42
  %189 = vset.pattern.permute.xlu0 2
  %190 = vperm.xlu0 %189, %v175
  %v191 = vpop.permute.xlu0 %190
  %192 = vset.pattern.permute.xlu0 2
  %193 = vperm.xlu0 %192, %v176
  %v194 = vpop.permute.xlu0 %193
  %195 = vset.pattern.permute.xlu0 2
  %196 = vperm.xlu0 %195, %v177
  %v197 = vpop.permute.xlu0 %196
  %198 = vset.pattern.permute.xlu0 2
  %199 = vperm.xlu0 %198, %v178
  %v200 = vpop.permute.xlu0 %199
  %201 = vset.pattern.permute.xlu0 2
  %202 = vperm.xlu0 %201, %v179
  %v203 = vpop.permute.xlu0 %202
  %204 = vset.pattern.permute.xlu0 2
  %205 = vperm.xlu0 %204, %v180
  %v206 = vpop.permute.xlu0 %205
  %207 = vset.pattern.permute.xlu0 2
  %208 = vperm.xlu0 %207, %v181
  %v209 = vpop.permute.xlu0 %208
  %210 = vset.pattern.permute.xlu0 2
  %211 = vperm.xlu0 %210, %v182
  %v212 = vpop.permute.xlu0 %211
  %213 = vset.pattern.permute.xlu0 2
  %214 = vperm.xlu0 %213, %v183
  %v215 = vpop.permute.xlu0 %214
  %216 = vset.pattern.permute.xlu0 2
  %217 = vperm.xlu0 %216, %v184
  %v218 = vpop.permute.xlu0 %217
  %219 = vset.pattern.permute.xlu0 2
  %220 = vperm.xlu0 %219, %v185
  %v221 = vpop.permute.xlu0 %220
  %222 = vset.pattern.permute.xlu0 2
  %223 = vperm.xlu0 %222, %v186
  %v224 = vpop.permute.xlu0 %223
  %225 = vset.pattern.permute.xlu0 2
  %226 = vperm.xlu0 %225, %v187
  %v227 = vpop.permute.xlu0 %226
  %228 = vset.pattern.permute.xlu0 2
  %229 = vperm.xlu0 %228, %v188
  %v230 = vpop.permute.xlu0 %229
  %vm231 = vcmp.eq.s32.totalorder %v34, %v191
  %vm232 = vcmp.eq.s32.totalorder %v34, %v194
  %vm233 = vcmp.eq.s32.totalorder %v34, %v197
  %vm234 = vcmp.eq.s32.totalorder %v34, %v200
  %vm235 = vcmp.eq.s32.totalorder %v34, %v203
  %vm236 = vcmp.eq.s32.totalorder %v34, %v206
  %vm237 = vcmp.eq.s32.totalorder %v34, %v209
  %vm238 = vcmp.eq.s32.totalorder %v34, %v212
  %vm239 = vcmp.eq.s32.totalorder %v34, %v215
  %vm240 = vcmp.eq.s32.totalorder %v34, %v218
  %vm241 = vcmp.eq.s32.totalorder %v34, %v221
  %vm242 = vcmp.eq.s32.totalorder %v34, %v224
  %vm243 = vcmp.eq.s32.totalorder %v34, %v227
  %vm244 = vcmp.eq.s32.totalorder %v34, %v230
  %vm245 = vmor %vm161, %vm231
  %vm246 = vmor %vm162, %vm232
  %vm247 = vmor %vm163, %vm233
  %vm248 = vmor %vm164, %vm234
  %vm249 = vmor %vm165, %vm235
  %vm250 = vmor %vm166, %vm236
  %vm251 = vmor %vm167, %vm237
  %vm252 = vmor %vm168, %vm238
  %vm253 = vmor %vm169, %vm239
  %vm254 = vmor %vm170, %vm240
  %vm255 = vmor %vm171, %vm241
  %vm256 = vmor %vm172, %vm242
  %vm257 = vmor %vm173, %vm243
  %vm258 = vmor %vm174, %vm244
  %v259 = vadd.s32 %v19, 63
  %v260 = vadd.s32 %v20, 63
  %v261 = vadd.s32 %v21, 63
  %v262 = vadd.s32 %v22, 63
  %v263 = vadd.s32 %v23, 63
  %v264 = vadd.s32 %v24, 63
  %v265 = vadd.s32 %v25, 63
  %v266 = vadd.s32 %v26, 63
  %v267 = vadd.s32 %v27, 63
  %v268 = vadd.s32 %v28, 63
  %v269 = vadd.s32 %v29, 63
  %v270 = vadd.s32 %v30, 63
  %v271 = vadd.s32 %v31, 63
  %v272 = vadd.s32 %v32, 63
  %273 = vset.pattern.permute.xlu0 3
  %274 = vperm.xlu0 %273, %v259
  %v275 = vpop.permute.xlu0 %274
  %276 = vset.pattern.permute.xlu0 3
  %277 = vperm.xlu0 %276, %v260
  %v278 = vpop.permute.xlu0 %277
  %279 = vset.pattern.permute.xlu0 3
  %280 = vperm.xlu0 %279, %v261
  %v281 = vpop.permute.xlu0 %280
  %282 = vset.pattern.permute.xlu0 3
  %283 = vperm.xlu0 %282, %v262
  %v284 = vpop.permute.xlu0 %283
  %285 = vset.pattern.permute.xlu0 3
  %286 = vperm.xlu0 %285, %v263
  %v287 = vpop.permute.xlu0 %286
  %288 = vset.pattern.permute.xlu0 3
  %289 = vperm.xlu0 %288, %v264
  %v290 = vpop.permute.xlu0 %289
  %291 = vset.pattern.permute.xlu0 3
  %292 = vperm.xlu0 %291, %v265
  %v293 = vpop.permute.xlu0 %292
  %294 = vset.pattern.permute.xlu0 3
  %295 = vperm.xlu0 %294, %v266
  %v296 = vpop.permute.xlu0 %295
  %297 = vset.pattern.permute.xlu0 3
  %298 = vperm.xlu0 %297, %v267
  %v299 = vpop.permute.xlu0 %298
  %300 = vset.pattern.permute.xlu0 3
  %301 = vperm.xlu0 %300, %v268
  %v302 = vpop.permute.xlu0 %301
  %303 = vset.pattern.permute.xlu0 3
  %304 = vperm.xlu0 %303, %v269
  %v305 = vpop.permute.xlu0 %304
  %306 = vset.pattern.permute.xlu0 3
  %307 = vperm.xlu0 %306, %v270
  %v308 = vpop.permute.xlu0 %307
  %309 = vset.pattern.permute.xlu0 3
  %310 = vperm.xlu0 %309, %v271
  %v311 = vpop.permute.xlu0 %310
  %312 = vset.pattern.permute.xlu0 3
  %313 = vperm.xlu0 %312, %v272
  %v314 = vpop.permute.xlu0 %313
  %vm315 = vcmp.eq.s32.totalorder %v34, %v275
  %vm316 = vcmp.eq.s32.totalorder %v34, %v278
  %vm317 = vcmp.eq.s32.totalorder %v34, %v281
  %vm318 = vcmp.eq.s32.totalorder %v34, %v284
  %vm319 = vcmp.eq.s32.totalorder %v34, %v287
  %vm320 = vcmp.eq.s32.totalorder %v34, %v290
  %vm321 = vcmp.eq.s32.totalorder %v34, %v293
  %vm322 = vcmp.eq.s32.totalorder %v34, %v296
  %vm323 = vcmp.eq.s32.totalorder %v34, %v299
  %vm324 = vcmp.eq.s32.totalorder %v34, %v302
  %vm325 = vcmp.eq.s32.totalorder %v34, %v305
  %vm326 = vcmp.eq.s32.totalorder %v34, %v308
  %vm327 = vcmp.eq.s32.totalorder %v34, %v311
  %vm328 = vcmp.eq.s32.totalorder %v34, %v314
  %vm329 = vmor %vm245, %vm315
  %vm330 = vmor %vm246, %vm316
  %vm331 = vmor %vm247, %vm317
  %vm332 = vmor %vm248, %vm318
  %vm333 = vmor %vm249, %vm319
  %vm334 = vmor %vm250, %vm320
  %vm335 = vmor %vm251, %vm321
  %vm336 = vmor %vm252, %vm322
  %vm337 = vmor %vm253, %vm323
  %vm338 = vmor %vm254, %vm324
  %vm339 = vmor %vm255, %vm325
  %vm340 = vmor %vm256, %vm326
  %vm341 = vmor %vm257, %vm327
  %vm342 = vmor %vm258, %vm328
  %v343 = vsel %vm329, 1, 0
  %v344 = vsel %vm330, 1, 0
  %v345 = vsel %vm331, 1, 0
  %v346 = vsel %vm332, 1, 0
  %v347 = vsel %vm333, 1, 0
  %v348 = vsel %vm334, 1, 0
  %v349 = vsel %vm335, 1, 0
  %v350 = vsel %vm336, 1, 0
  %v351 = vsel %vm337, 1, 0
  %v352 = vsel %vm338, 1, 0
  %v353 = vsel %vm339, 1, 0
  %v354 = vsel %vm340, 1, 0
  %v355 = vsel %vm341, 1, 0
  %v356 = vsel %vm342, 1, 0
  %v357 = vcvt.s32.f32 %v343
  %v358 = vcvt.s32.f32 %v344
  %v359 = vcvt.s32.f32 %v345
  %v360 = vcvt.s32.f32 %v346
  %v361 = vcvt.s32.f32 %v347
  %v362 = vcvt.s32.f32 %v348
  %v363 = vcvt.s32.f32 %v349
  %v364 = vcvt.s32.f32 %v350
  %v365 = vcvt.s32.f32 %v351
  %v366 = vcvt.s32.f32 %v352
  %v367 = vcvt.s32.f32 %v353
  %v368 = vcvt.s32.f32 %v354
  %v369 = vcvt.s32.f32 %v355
  %v370 = vcvt.s32.f32 %v356
  %v371 = vld [vmem:[%s2] sm:$0xff]
  %v372 = vld [vmem:[%s2 + $0x8] sm:$0xff]
  %v373 = vld [vmem:[%s2 + $0x10] sm:$0xff]
  %v374 = vld [vmem:[%s2 + $0x18] sm:$0xff]
  %v375 = vld [vmem:[%s2 + $0x20] sm:$0xff]
  %v376 = vld [vmem:[%s2 + $0x28] sm:$0xff]
  %v377 = vld [vmem:[%s2 + $0x30] sm:$0xff]
  %v378 = vld [vmem:[%s2 + $0x38] sm:$0xff]
  %v379 = vld [vmem:[%s2 + $0x40] sm:$0xff]
  %v380 = vld [vmem:[%s2 + $0x48] sm:$0xff]
  %v381 = vld [vmem:[%s2 + $0x50] sm:$0xf]
  %vm382 = vcmask 687104
  %v384 = vsel %vm382, %v357, 0
  %v387 = vsel %vm382, %v358, 0
  %v390 = vsel %vm382, %v359, 0
  %v393 = vsel %vm382, %v360, 0
  %v396 = vsel %vm382, %v361, 0
  %v399 = vsel %vm382, %v362, 0
  %v402 = vsel %vm382, %v363, 0
  %v405 = vsel %vm382, %v364, 0
  %v408 = vsel %vm382, %v365, 0
  %v411 = vsel %vm382, %v366, 0
  %v414 = vsel %vm382, %v367, 0
  %v417 = vsel %vm382, %v368, 0
  %v420 = vsel %vm382, %v369, 0
  %v423 = vsel %vm382, %v370, 0
  %vm425 = vcmask 1043456
  %v427 = vsel %vm425, %v381, 0
  %429 = vmatpush.msra.mxu0 0.0
  %430 = vmatpush.msra.mxu0 0.0
  %431 = vmatpush.msra.mxu0 0.0
  %432 = vmatpush.msra.mxu0 0.0
  %433 = vmatpush.msra.mxu0 0.0
  %434 = vmatpush.msra.mxu0 %v427
  %435 = vmatpush.msra.mxu0 %v380
  %436 = vmatpush.msra.mxu0 %v379
  %437 = vmatpush.msra.mxu0 %v378
  %438 = vmatpush.msra.mxu0 %v377
  %439 = vmatpush.msra.mxu0 %v376
  %440 = vmatpush.msra.mxu0 %v375
  %441 = vmatpush.msra.mxu0 %v374
  %442 = vmatpush.msra.mxu0 %v373
  %443 = vmatpush.msra.mxu0 %v372
  %444 = vmatpush.msra.mxu0 %v371
  %445 = vmatmul.f32.gmra.mxu0 %v384
  %v446 = vpop.f32.mrf.mxu0
  %v447 = vadd.f32 0.0, %v446
  %448 = vmatmul.f32.gmra.mxu0 %v387
  %v449 = vpop.f32.mrf.mxu0
  %v450 = vadd.f32 0.0, %v449
  %451 = vmatmul.f32.gmra.mxu0 %v390
  %v452 = vpop.f32.mrf.mxu0
  %v453 = vadd.f32 0.0, %v452
  %454 = vmatmul.f32.gmra.mxu0 %v393
  %v455 = vpop.f32.mrf.mxu0
  %v456 = vadd.f32 0.0, %v455
  %457 = vmatmul.f32.gmra.mxu0 %v396
  %v458 = vpop.f32.mrf.mxu0
  %v459 = vadd.f32 0.0, %v458
  %460 = vmatmul.f32.gmra.mxu0 %v399
  %v461 = vpop.f32.mrf.mxu0
  %v462 = vadd.f32 0.0, %v461
  %463 = vmatmul.f32.gmra.mxu0 %v402
  %v464 = vpop.f32.mrf.mxu0
  %v465 = vadd.f32 0.0, %v464
  %466 = vmatmul.f32.gmra.mxu0 %v405
  %v467 = vpop.f32.mrf.mxu0
  %v468 = vadd.f32 0.0, %v467
  %469 = vmatmul.f32.gmra.mxu0 %v408
  %v470 = vpop.f32.mrf.mxu0
  %v471 = vadd.f32 0.0, %v470
  %472 = vmatmul.f32.gmra.mxu0 %v411
  %v473 = vpop.f32.mrf.mxu0
  %v474 = vadd.f32 0.0, %v473
  %475 = vmatmul.f32.gmra.mxu0 %v414
  %v476 = vpop.f32.mrf.mxu0
  %v477 = vadd.f32 0.0, %v476
  %478 = vmatmul.f32.gmra.mxu0 %v417
  %v479 = vpop.f32.mrf.mxu0
  %v480 = vadd.f32 0.0, %v479
  %481 = vmatmul.f32.gmra.mxu0 %v420
  %v482 = vpop.f32.mrf.mxu0
  %v483 = vadd.f32 0.0, %v482
  %484 = vmatmul.f32.gmra.mxu0 %v423
  %v485 = vpop.f32.mrf.mxu0
  %v486 = vadd.f32 0.0, %v485
  %487 = vdwg.mxu0
  %488 = vst [vmem:[%s4] sm:$0xff] %v447
  %489 = vst [vmem:[%s4 + $0x8] sm:$0xff] %v450
  %490 = vst [vmem:[%s4 + $0x10] sm:$0xff] %v453
  %491 = vst [vmem:[%s4 + $0x18] sm:$0xff] %v456
  %492 = vst [vmem:[%s4 + $0x20] sm:$0xff] %v459
  %493 = vst [vmem:[%s4 + $0x28] sm:$0xff] %v462
  %494 = vst [vmem:[%s4 + $0x30] sm:$0xff] %v465
  %495 = vst [vmem:[%s4 + $0x38] sm:$0xff] %v468
  %496 = vst [vmem:[%s4 + $0x40] sm:$0xff] %v471
  %497 = vst [vmem:[%s4 + $0x48] sm:$0xff] %v474
  %498 = vst [vmem:[%s4 + $0x50] sm:$0xff] %v477
  %499 = vst [vmem:[%s4 + $0x58] sm:$0xff] %v480
  %500 = vst [vmem:[%s4 + $0x60] sm:$0xff] %v483
  %501 = vst [vmem:[%s4 + $0x68] sm:$0xff] %v486
  %v502 = vld [vmem:[%s1] sm:$0xff]
  %v503 = vld [vmem:[%s1 + $0x8] sm:$0xff]
  %v504 = vld [vmem:[%s1 + $0x10] sm:$0xff]
  %v505 = vld [vmem:[%s1 + $0x18] sm:$0xff]
  %v506 = vld [vmem:[%s1 + $0x20] sm:$0xff]
  %v507 = vld [vmem:[%s1 + $0x28] sm:$0xff]
  %v508 = vld [vmem:[%s1 + $0x30] sm:$0xff]
  %v509 = vld [vmem:[%s1 + $0x38] sm:$0xff]
  %v510 = vld [vmem:[%s1 + $0x40] sm:$0xff]
  %v511 = vld [vmem:[%s1 + $0x48] sm:$0xff]
  %v512 = vld [vmem:[%s1 + $0x50] sm:$0xff]
  %v513 = vld [vmem:[%s1 + $0x58] sm:$0xff]
  %v514 = vld [vmem:[%s1 + $0x60] sm:$0xff]
  %v515 = vld [vmem:[%s1 + $0x68] sm:$0xff]
  %v516 = vld [vmem:[%s1 + $0x70] sm:$0xff]
  %v517 = vld [vmem:[%s1 + $0x78] sm:$0xff]
  %v518 = vld [vmem:[%s1 + $0x80] sm:$0xff]
  %v519 = vld [vmem:[%s1 + $0x88] sm:$0xff]
  %v520 = vld [vmem:[%s1 + $0x90] sm:$0xff]
  %v521 = vld [vmem:[%s1 + $0x98] sm:$0xff]
  %v522 = vld [vmem:[%s1 + $0xa0] sm:$0xff]
  %v523 = vld [vmem:[%s1 + $0xa8] sm:$0xff]
  %v524 = vld [vmem:[%s1 + $0xb0] sm:$0xff]
  %v525 = vld [vmem:[%s1 + $0xb8] sm:$0xff]
  %v526 = vld [vmem:[%s1 + $0xc0] sm:$0xff]
  %v527 = vld [vmem:[%s1 + $0xc8] sm:$0xff]
  %v528 = vld [vmem:[%s1 + $0xd0] sm:$0xff]
  %v529 = vld [vmem:[%s1 + $0xd8] sm:$0xff]
  %v530 = vld [vmem:[%s1 + $0xe0] sm:$0xff]
  %v531 = vld [vmem:[%s1 + $0xe8] sm:$0xff]
  %v532 = vld [vmem:[%s1 + $0xf0] sm:$0xff]
  %v533 = vld [vmem:[%s1 + $0xf8] sm:$0xff]
  %v534 = vld [vmem:[%s1 + $0x100] sm:$0xff]
  %v535 = vld [vmem:[%s1 + $0x108] sm:$0xff]
  %536 = vset.pattern.permute.xlu0 0
  %537 = vperm.xlu0 %536, %v502
  %v538 = vpop.permute.xlu0 %537
  %539 = vset.pattern.permute.xlu0 0
  %540 = vperm.xlu0 %539, %v503
  %v541 = vpop.permute.xlu0 %540
  %542 = vset.pattern.permute.xlu0 0
  %543 = vperm.xlu0 %542, %v504
  %v544 = vpop.permute.xlu0 %543
  %545 = vset.pattern.permute.xlu0 0
  %546 = vperm.xlu0 %545, %v505
  %v547 = vpop.permute.xlu0 %546
  %548 = vset.pattern.permute.xlu0 0
  %549 = vperm.xlu0 %548, %v506
  %v550 = vpop.permute.xlu0 %549
  %551 = vset.pattern.permute.xlu0 0
  %552 = vperm.xlu0 %551, %v507
  %v553 = vpop.permute.xlu0 %552
  %554 = vset.pattern.permute.xlu0 0
  %555 = vperm.xlu0 %554, %v508
  %v556 = vpop.permute.xlu0 %555
  %557 = vset.pattern.permute.xlu0 0
  %558 = vperm.xlu0 %557, %v509
  %v559 = vpop.permute.xlu0 %558
  %560 = vset.pattern.permute.xlu0 0
  %561 = vperm.xlu0 %560, %v510
  %v562 = vpop.permute.xlu0 %561
  %563 = vset.pattern.permute.xlu0 0
  %564 = vperm.xlu0 %563, %v511
  %v565 = vpop.permute.xlu0 %564
  %566 = vset.pattern.permute.xlu0 0
  %567 = vperm.xlu0 %566, %v512
  %v568 = vpop.permute.xlu0 %567
  %569 = vset.pattern.permute.xlu0 0
  %570 = vperm.xlu0 %569, %v513
  %v571 = vpop.permute.xlu0 %570
  %572 = vset.pattern.permute.xlu0 0
  %573 = vperm.xlu0 %572, %v514
  %v574 = vpop.permute.xlu0 %573
  %575 = vset.pattern.permute.xlu0 0
  %576 = vperm.xlu0 %575, %v515
  %v577 = vpop.permute.xlu0 %576
  %578 = vset.pattern.permute.xlu0 0
  %579 = vperm.xlu0 %578, %v516
  %v580 = vpop.permute.xlu0 %579
  %581 = vset.pattern.permute.xlu0 0
  %582 = vperm.xlu0 %581, %v517
  %v583 = vpop.permute.xlu0 %582
  %584 = vset.pattern.permute.xlu0 0
  %585 = vperm.xlu0 %584, %v518
  %v586 = vpop.permute.xlu0 %585
  %587 = vset.pattern.permute.xlu0 0
  %588 = vperm.xlu0 %587, %v519
  %v589 = vpop.permute.xlu0 %588
  %590 = vset.pattern.permute.xlu0 0
  %591 = vperm.xlu0 %590, %v520
  %v592 = vpop.permute.xlu0 %591
  %593 = vset.pattern.permute.xlu0 0
  %594 = vperm.xlu0 %593, %v521
  %v595 = vpop.permute.xlu0 %594
  %596 = vset.pattern.permute.xlu0 0
  %597 = vperm.xlu0 %596, %v522
  %v598 = vpop.permute.xlu0 %597
  %599 = vset.pattern.permute.xlu0 0
  %600 = vperm.xlu0 %599, %v523
  %v601 = vpop.permute.xlu0 %600
  %602 = vset.pattern.permute.xlu0 0
  %603 = vperm.xlu0 %602, %v524
  %v604 = vpop.permute.xlu0 %603
  %605 = vset.pattern.permute.xlu0 0
  %606 = vperm.xlu0 %605, %v525
  %v607 = vpop.permute.xlu0 %606
  %608 = vset.pattern.permute.xlu0 0
  %609 = vperm.xlu0 %608, %v526
  %v610 = vpop.permute.xlu0 %609
  %611 = vset.pattern.permute.xlu0 0
  %612 = vperm.xlu0 %611, %v527
  %v613 = vpop.permute.xlu0 %612
  %614 = vset.pattern.permute.xlu0 0
  %615 = vperm.xlu0 %614, %v528
  %v616 = vpop.permute.xlu0 %615
  %617 = vset.pattern.permute.xlu0 0
  %618 = vperm.xlu0 %617, %v529
  %v619 = vpop.permute.xlu0 %618
  %620 = vset.pattern.permute.xlu0 0
  %621 = vperm.xlu0 %620, %v530
  %v622 = vpop.permute.xlu0 %621
  %623 = vset.pattern.permute.xlu0 0
  %624 = vperm.xlu0 %623, %v531
  %v625 = vpop.permute.xlu0 %624
  %626 = vset.pattern.permute.xlu0 0
  %627 = vperm.xlu0 %626, %v532
  %v628 = vpop.permute.xlu0 %627
  %629 = vset.pattern.permute.xlu0 0
  %630 = vperm.xlu0 %629, %v533
  %v631 = vpop.permute.xlu0 %630
  %632 = vset.pattern.permute.xlu0 0
  %633 = vperm.xlu0 %632, %v534
  %v634 = vpop.permute.xlu0 %633
  %635 = vset.pattern.permute.xlu0 0
  %636 = vperm.xlu0 %635, %v535
  %v637 = vpop.permute.xlu0 %636
  %vm638 = vcmp.eq.s32.totalorder %v34, %v538
  %vm639 = vcmp.eq.s32.totalorder %v34, %v541
  %vm640 = vcmp.eq.s32.totalorder %v34, %v544
  %vm641 = vcmp.eq.s32.totalorder %v34, %v547
  %vm642 = vcmp.eq.s32.totalorder %v34, %v550
  %vm643 = vcmp.eq.s32.totalorder %v34, %v553
  %vm644 = vcmp.eq.s32.totalorder %v34, %v556
  %vm645 = vcmp.eq.s32.totalorder %v34, %v559
  %vm646 = vcmp.eq.s32.totalorder %v34, %v562
  %vm647 = vcmp.eq.s32.totalorder %v34, %v565
  %vm648 = vcmp.eq.s32.totalorder %v34, %v568
  %vm649 = vcmp.eq.s32.totalorder %v34, %v571
  %vm650 = vcmp.eq.s32.totalorder %v34, %v574
  %vm651 = vcmp.eq.s32.totalorder %v34, %v577
  %vm652 = vcmp.eq.s32.totalorder %v34, %v580
  %vm653 = vcmp.eq.s32.totalorder %v34, %v583
  %vm654 = vcmp.eq.s32.totalorder %v34, %v586
  %vm655 = vcmp.eq.s32.totalorder %v34, %v589
  %vm656 = vcmp.eq.s32.totalorder %v34, %v592
  %vm657 = vcmp.eq.s32.totalorder %v34, %v595
  %vm658 = vcmp.eq.s32.totalorder %v34, %v598
  %vm659 = vcmp.eq.s32.totalorder %v34, %v601
  %vm660 = vcmp.eq.s32.totalorder %v34, %v604
  %vm661 = vcmp.eq.s32.totalorder %v34, %v607
  %vm662 = vcmp.eq.s32.totalorder %v34, %v610
  %vm663 = vcmp.eq.s32.totalorder %v34, %v613
  %vm664 = vcmp.eq.s32.totalorder %v34, %v616
  %vm665 = vcmp.eq.s32.totalorder %v34, %v619
  %vm666 = vcmp.eq.s32.totalorder %v34, %v622
  %vm667 = vcmp.eq.s32.totalorder %v34, %v625
  %vm668 = vcmp.eq.s32.totalorder %v34, %v628
  %vm669 = vcmp.eq.s32.totalorder %v34, %v631
  %vm670 = vcmp.eq.s32.totalorder %v34, %v634
  %vm671 = vcmp.eq.s32.totalorder %v34, %v637
  %v672 = vadd.s32 %v502, 21
  %v673 = vadd.s32 %v503, 21
  %v674 = vadd.s32 %v504, 21
  %v675 = vadd.s32 %v505, 21
  %v676 = vadd.s32 %v506, 21
  %v677 = vadd.s32 %v507, 21
  %v678 = vadd.s32 %v508, 21
  %v679 = vadd.s32 %v509, 21
  %v680 = vadd.s32 %v510, 21
  %v681 = vadd.s32 %v511, 21
  %v682 = vadd.s32 %v512, 21
  %v683 = vadd.s32 %v513, 21
  %v684 = vadd.s32 %v514, 21
  %v685 = vadd.s32 %v515, 21
  %v686 = vadd.s32 %v516, 21
  %v687 = vadd.s32 %v517, 21
  %v688 = vadd.s32 %v518, 21
  %v689 = vadd.s32 %v519, 21
  %v690 = vadd.s32 %v520, 21
  %v691 = vadd.s32 %v521, 21
  %v692 = vadd.s32 %v522, 21
  %v693 = vadd.s32 %v523, 21
  %v694 = vadd.s32 %v524, 21
  %v695 = vadd.s32 %v525, 21
  %v696 = vadd.s32 %v526, 21
  %v697 = vadd.s32 %v527, 21
  %v698 = vadd.s32 %v528, 21
  %v699 = vadd.s32 %v529, 21
  %v700 = vadd.s32 %v530, 21
  %v701 = vadd.s32 %v531, 21
  %v702 = vadd.s32 %v532, 21
  %v703 = vadd.s32 %v533, 21
  %v704 = vadd.s32 %v534, 21
  %v705 = vadd.s32 %v535, 21
  %706 = vset.pattern.permute.xlu0 1
  %707 = vperm.xlu0 %706, %v672
  %v708 = vpop.permute.xlu0 %707
  %709 = vset.pattern.permute.xlu0 1
  %710 = vperm.xlu0 %709, %v673
  %v711 = vpop.permute.xlu0 %710
  %712 = vset.pattern.permute.xlu0 1
  %713 = vperm.xlu0 %712, %v674
  %v714 = vpop.permute.xlu0 %713
  %715 = vset.pattern.permute.xlu0 1
  %716 = vperm.xlu0 %715, %v675
  %v717 = vpop.permute.xlu0 %716
  %718 = vset.pattern.permute.xlu0 1
  %719 = vperm.xlu0 %718, %v676
  %v720 = vpop.permute.xlu0 %719
  %721 = vset.pattern.permute.xlu0 1
  %722 = vperm.xlu0 %721, %v677
  %v723 = vpop.permute.xlu0 %722
  %724 = vset.pattern.permute.xlu0 1
  %725 = vperm.xlu0 %724, %v678
  %v726 = vpop.permute.xlu0 %725
  %727 = vset.pattern.permute.xlu0 1
  %728 = vperm.xlu0 %727, %v679
  %v729 = vpop.permute.xlu0 %728
  %730 = vset.pattern.permute.xlu0 1
  %731 = vperm.xlu0 %730, %v680
  %v732 = vpop.permute.xlu0 %731
  %733 = vset.pattern.permute.xlu0 1
  %734 = vperm.xlu0 %733, %v681
  %v735 = vpop.permute.xlu0 %734
  %736 = vset.pattern.permute.xlu0 1
  %737 = vperm.xlu0 %736, %v682
  %v738 = vpop.permute.xlu0 %737
  %739 = vset.pattern.permute.xlu0 1
  %740 = vperm.xlu0 %739, %v683
  %v741 = vpop.permute.xlu0 %740
  %742 = vset.pattern.permute.xlu0 1
  %743 = vperm.xlu0 %742, %v684
  %v744 = vpop.permute.xlu0 %743
  %745 = vset.pattern.permute.xlu0 1
  %746 = vperm.xlu0 %745, %v685
  %v747 = vpop.permute.xlu0 %746
  %748 = vset.pattern.permute.xlu0 1
  %749 = vperm.xlu0 %748, %v686
  %v750 = vpop.permute.xlu0 %749
  %751 = vset.pattern.permute.xlu0 1
  %752 = vperm.xlu0 %751, %v687
  %v753 = vpop.permute.xlu0 %752
  %754 = vset.pattern.permute.xlu0 1
  %755 = vperm.xlu0 %754, %v688
  %v756 = vpop.permute.xlu0 %755
  %757 = vset.pattern.permute.xlu0 1
  %758 = vperm.xlu0 %757, %v689
  %v759 = vpop.permute.xlu0 %758
  %760 = vset.pattern.permute.xlu0 1
  %761 = vperm.xlu0 %760, %v690
  %v762 = vpop.permute.xlu0 %761
  %763 = vset.pattern.permute.xlu0 1
  %764 = vperm.xlu0 %763, %v691
  %v765 = vpop.permute.xlu0 %764
  %766 = vset.pattern.permute.xlu0 1
  %767 = vperm.xlu0 %766, %v692
  %v768 = vpop.permute.xlu0 %767
  %769 = vset.pattern.permute.xlu0 1
  %770 = vperm.xlu0 %769, %v693
  %v771 = vpop.permute.xlu0 %770
  %772 = vset.pattern.permute.xlu0 1
  %773 = vperm.xlu0 %772, %v694
  %v774 = vpop.permute.xlu0 %773
  %775 = vset.pattern.permute.xlu0 1
  %776 = vperm.xlu0 %775, %v695
  %v777 = vpop.permute.xlu0 %776
  %778 = vset.pattern.permute.xlu0 1
  %779 = vperm.xlu0 %778, %v696
  %v780 = vpop.permute.xlu0 %779
  %781 = vset.pattern.permute.xlu0 1
  %782 = vperm.xlu0 %781, %v697
  %v783 = vpop.permute.xlu0 %782
  %784 = vset.pattern.permute.xlu0 1
  %785 = vperm.xlu0 %784, %v698
  %v786 = vpop.permute.xlu0 %785
  %787 = vset.pattern.permute.xlu0 1
  %788 = vperm.xlu0 %787, %v699
  %v789 = vpop.permute.xlu0 %788
  %790 = vset.pattern.permute.xlu0 1
  %791 = vperm.xlu0 %790, %v700
  %v792 = vpop.permute.xlu0 %791
  %793 = vset.pattern.permute.xlu0 1
  %794 = vperm.xlu0 %793, %v701
  %v795 = vpop.permute.xlu0 %794
  %796 = vset.pattern.permute.xlu0 1
  %797 = vperm.xlu0 %796, %v702
  %v798 = vpop.permute.xlu0 %797
  %799 = vset.pattern.permute.xlu0 1
  %800 = vperm.xlu0 %799, %v703
  %v801 = vpop.permute.xlu0 %800
  %802 = vset.pattern.permute.xlu0 1
  %803 = vperm.xlu0 %802, %v704
  %v804 = vpop.permute.xlu0 %803
  %805 = vset.pattern.permute.xlu0 1
  %806 = vperm.xlu0 %805, %v705
  %v807 = vpop.permute.xlu0 %806
  %vm808 = vcmp.eq.s32.totalorder %v34, %v708
  %vm809 = vcmp.eq.s32.totalorder %v34, %v711
  %vm810 = vcmp.eq.s32.totalorder %v34, %v714
  %vm811 = vcmp.eq.s32.totalorder %v34, %v717
  %vm812 = vcmp.eq.s32.totalorder %v34, %v720
  %vm813 = vcmp.eq.s32.totalorder %v34, %v723
  %vm814 = vcmp.eq.s32.totalorder %v34, %v726
  %vm815 = vcmp.eq.s32.totalorder %v34, %v729
  %vm816 = vcmp.eq.s32.totalorder %v34, %v732
  %vm817 = vcmp.eq.s32.totalorder %v34, %v735
  %vm818 = vcmp.eq.s32.totalorder %v34, %v738
  %vm819 = vcmp.eq.s32.totalorder %v34, %v741
  %vm820 = vcmp.eq.s32.totalorder %v34, %v744
  %vm821 = vcmp.eq.s32.totalorder %v34, %v747
  %vm822 = vcmp.eq.s32.totalorder %v34, %v750
  %vm823 = vcmp.eq.s32.totalorder %v34, %v753
  %vm824 = vcmp.eq.s32.totalorder %v34, %v756
  %vm825 = vcmp.eq.s32.totalorder %v34, %v759
  %vm826 = vcmp.eq.s32.totalorder %v34, %v762
  %vm827 = vcmp.eq.s32.totalorder %v34, %v765
  %vm828 = vcmp.eq.s32.totalorder %v34, %v768
  %vm829 = vcmp.eq.s32.totalorder %v34, %v771
  %vm830 = vcmp.eq.s32.totalorder %v34, %v774
  %vm831 = vcmp.eq.s32.totalorder %v34, %v777
  %vm832 = vcmp.eq.s32.totalorder %v34, %v780
  %vm833 = vcmp.eq.s32.totalorder %v34, %v783
  %vm834 = vcmp.eq.s32.totalorder %v34, %v786
  %vm835 = vcmp.eq.s32.totalorder %v34, %v789
  %vm836 = vcmp.eq.s32.totalorder %v34, %v792
  %vm837 = vcmp.eq.s32.totalorder %v34, %v795
  %vm838 = vcmp.eq.s32.totalorder %v34, %v798
  %vm839 = vcmp.eq.s32.totalorder %v34, %v801
  %vm840 = vcmp.eq.s32.totalorder %v34, %v804
  %vm841 = vcmp.eq.s32.totalorder %v34, %v807
  %vm842 = vmor %vm638, %vm808
  %vm843 = vmor %vm639, %vm809
  %vm844 = vmor %vm640, %vm810
  %vm845 = vmor %vm641, %vm811
  %vm846 = vmor %vm642, %vm812
  %vm847 = vmor %vm643, %vm813
  %vm848 = vmor %vm644, %vm814
  %vm849 = vmor %vm645, %vm815
  %vm850 = vmor %vm646, %vm816
  %vm851 = vmor %vm647, %vm817
  %vm852 = vmor %vm648, %vm818
  %vm853 = vmor %vm649, %vm819
  %vm854 = vmor %vm650, %vm820
  %vm855 = vmor %vm651, %vm821
  %vm856 = vmor %vm652, %vm822
  %vm857 = vmor %vm653, %vm823
  %vm858 = vmor %vm654, %vm824
  %vm859 = vmor %vm655, %vm825
  %vm860 = vmor %vm656, %vm826
  %vm861 = vmor %vm657, %vm827
  %vm862 = vmor %vm658, %vm828
  %vm863 = vmor %vm659, %vm829
  %vm864 = vmor %vm660, %vm830
  %vm865 = vmor %vm661, %vm831
  %vm866 = vmor %vm662, %vm832
  %vm867 = vmor %vm663, %vm833
  %vm868 = vmor %vm664, %vm834
  %vm869 = vmor %vm665, %vm835
  %vm870 = vmor %vm666, %vm836
  %vm871 = vmor %vm667, %vm837
  %vm872 = vmor %vm668, %vm838
  %vm873 = vmor %vm669, %vm839
  %vm874 = vmor %vm670, %vm840
  %vm875 = vmor %vm671, %vm841
  %v876 = vadd.s32 %v502, 42
  %v877 = vadd.s32 %v503, 42
  %v878 = vadd.s32 %v504, 42
  %v879 = vadd.s32 %v505, 42
  %v880 = vadd.s32 %v506, 42
  %v881 = vadd.s32 %v507, 42
  %v882 = vadd.s32 %v508, 42
  %v883 = vadd.s32 %v509, 42
  %v884 = vadd.s32 %v510, 42
  %v885 = vadd.s32 %v511, 42
  %v886 = vadd.s32 %v512, 42
  %v887 = vadd.s32 %v513, 42
  %v888 = vadd.s32 %v514, 42
  %v889 = vadd.s32 %v515, 42
  %v890 = vadd.s32 %v516, 42
  %v891 = vadd.s32 %v517, 42
  %v892 = vadd.s32 %v518, 42
  %v893 = vadd.s32 %v519, 42
  %v894 = vadd.s32 %v520, 42
  %v895 = vadd.s32 %v521, 42
  %v896 = vadd.s32 %v522, 42
  %v897 = vadd.s32 %v523, 42
  %v898 = vadd.s32 %v524, 42
  %v899 = vadd.s32 %v525, 42
  %v900 = vadd.s32 %v526, 42
  %v901 = vadd.s32 %v527, 42
  %v902 = vadd.s32 %v528, 42
  %v903 = vadd.s32 %v529, 42
  %v904 = vadd.s32 %v530, 42
  %v905 = vadd.s32 %v531, 42
  %v906 = vadd.s32 %v532, 42
  %v907 = vadd.s32 %v533, 42
  %v908 = vadd.s32 %v534, 42
  %v909 = vadd.s32 %v535, 42
  %910 = vset.pattern.permute.xlu0 2
  %911 = vperm.xlu0 %910, %v876
  %v912 = vpop.permute.xlu0 %911
  %913 = vset.pattern.permute.xlu0 2
  %914 = vperm.xlu0 %913, %v877
  %v915 = vpop.permute.xlu0 %914
  %916 = vset.pattern.permute.xlu0 2
  %917 = vperm.xlu0 %916, %v878
  %v918 = vpop.permute.xlu0 %917
  %919 = vset.pattern.permute.xlu0 2
  %920 = vperm.xlu0 %919, %v879
  %v921 = vpop.permute.xlu0 %920
  %922 = vset.pattern.permute.xlu0 2
  %923 = vperm.xlu0 %922, %v880
  %v924 = vpop.permute.xlu0 %923
  %925 = vset.pattern.permute.xlu0 2
  %926 = vperm.xlu0 %925, %v881
  %v927 = vpop.permute.xlu0 %926
  %928 = vset.pattern.permute.xlu0 2
  %929 = vperm.xlu0 %928, %v882
  %v930 = vpop.permute.xlu0 %929
  %931 = vset.pattern.permute.xlu0 2
  %932 = vperm.xlu0 %931, %v883
  %v933 = vpop.permute.xlu0 %932
  %934 = vset.pattern.permute.xlu0 2
  %935 = vperm.xlu0 %934, %v884
  %v936 = vpop.permute.xlu0 %935
  %937 = vset.pattern.permute.xlu0 2
  %938 = vperm.xlu0 %937, %v885
  %v939 = vpop.permute.xlu0 %938
  %940 = vset.pattern.permute.xlu0 2
  %941 = vperm.xlu0 %940, %v886
  %v942 = vpop.permute.xlu0 %941
  %943 = vset.pattern.permute.xlu0 2
  %944 = vperm.xlu0 %943, %v887
  %v945 = vpop.permute.xlu0 %944
  %946 = vset.pattern.permute.xlu0 2
  %947 = vperm.xlu0 %946, %v888
  %v948 = vpop.permute.xlu0 %947
  %949 = vset.pattern.permute.xlu0 2
  %950 = vperm.xlu0 %949, %v889
  %v951 = vpop.permute.xlu0 %950
  %952 = vset.pattern.permute.xlu0 2
  %953 = vperm.xlu0 %952, %v890
  %v954 = vpop.permute.xlu0 %953
  %955 = vset.pattern.permute.xlu0 2
  %956 = vperm.xlu0 %955, %v891
  %v957 = vpop.permute.xlu0 %956
  %958 = vset.pattern.permute.xlu0 2
  %959 = vperm.xlu0 %958, %v892
  %v960 = vpop.permute.xlu0 %959
  %961 = vset.pattern.permute.xlu0 2
  %962 = vperm.xlu0 %961, %v893
  %v963 = vpop.permute.xlu0 %962
  %964 = vset.pattern.permute.xlu0 2
  %965 = vperm.xlu0 %964, %v894
  %v966 = vpop.permute.xlu0 %965
  %967 = vset.pattern.permute.xlu0 2
  %968 = vperm.xlu0 %967, %v895
  %v969 = vpop.permute.xlu0 %968
  %970 = vset.pattern.permute.xlu0 2
  %971 = vperm.xlu0 %970, %v896
  %v972 = vpop.permute.xlu0 %971
  %973 = vset.pattern.permute.xlu0 2
  %974 = vperm.xlu0 %973, %v897
  %v975 = vpop.permute.xlu0 %974
  %976 = vset.pattern.permute.xlu0 2
  %977 = vperm.xlu0 %976, %v898
  %v978 = vpop.permute.xlu0 %977
  %979 = vset.pattern.permute.xlu0 2
  %980 = vperm.xlu0 %979, %v899
  %v981 = vpop.permute.xlu0 %980
  %982 = vset.pattern.permute.xlu0 2
  %983 = vperm.xlu0 %982, %v900
  %v984 = vpop.permute.xlu0 %983
  %985 = vset.pattern.permute.xlu0 2
  %986 = vperm.xlu0 %985, %v901
  %v987 = vpop.permute.xlu0 %986
  %988 = vset.pattern.permute.xlu0 2
  %989 = vperm.xlu0 %988, %v902
  %v990 = vpop.permute.xlu0 %989
  %991 = vset.pattern.permute.xlu0 2
  %992 = vperm.xlu0 %991, %v903
  %v993 = vpop.permute.xlu0 %992
  %994 = vset.pattern.permute.xlu0 2
  %995 = vperm.xlu0 %994, %v904
  %v996 = vpop.permute.xlu0 %995
  %997 = vset.pattern.permute.xlu0 2
  %998 = vperm.xlu0 %997, %v905
  %v999 = vpop.permute.xlu0 %998
  %1000 = vset.pattern.permute.xlu0 2
  %1001 = vperm.xlu0 %1000, %v906
  %v1002 = vpop.permute.xlu0 %1001
  %1003 = vset.pattern.permute.xlu0 2
  %1004 = vperm.xlu0 %1003, %v907
  %v1005 = vpop.permute.xlu0 %1004
  %1006 = vset.pattern.permute.xlu0 2
  %1007 = vperm.xlu0 %1006, %v908
  %v1008 = vpop.permute.xlu0 %1007
  %1009 = vset.pattern.permute.xlu0 2
  %1010 = vperm.xlu0 %1009, %v909
  %v1011 = vpop.permute.xlu0 %1010
  %vm1012 = vcmp.eq.s32.totalorder %v34, %v912
  %vm1013 = vcmp.eq.s32.totalorder %v34, %v915
  %vm1014 = vcmp.eq.s32.totalorder %v34, %v918
  %vm1015 = vcmp.eq.s32.totalorder %v34, %v921
  %vm1016 = vcmp.eq.s32.totalorder %v34, %v924
  %vm1017 = vcmp.eq.s32.totalorder %v34, %v927
  %vm1018 = vcmp.eq.s32.totalorder %v34, %v930
  %vm1019 = vcmp.eq.s32.totalorder %v34, %v933
  %vm1020 = vcmp.eq.s32.totalorder %v34, %v936
  %vm1021 = vcmp.eq.s32.totalorder %v34, %v939
  %vm1022 = vcmp.eq.s32.totalorder %v34, %v942
  %vm1023 = vcmp.eq.s32.totalorder %v34, %v945
  %vm1024 = vcmp.eq.s32.totalorder %v34, %v948
  %vm1025 = vcmp.eq.s32.totalorder %v34, %v951
  %vm1026 = vcmp.eq.s32.totalorder %v34, %v954
  %vm1027 = vcmp.eq.s32.totalorder %v34, %v957
  %vm1028 = vcmp.eq.s32.totalorder %v34, %v960
  %vm1029 = vcmp.eq.s32.totalorder %v34, %v963
  %vm1030 = vcmp.eq.s32.totalorder %v34, %v966
  %vm1031 = vcmp.eq.s32.totalorder %v34, %v969
  %vm1032 = vcmp.eq.s32.totalorder %v34, %v972
  %vm1033 = vcmp.eq.s32.totalorder %v34, %v975
  %vm1034 = vcmp.eq.s32.totalorder %v34, %v978
  %vm1035 = vcmp.eq.s32.totalorder %v34, %v981
  %vm1036 = vcmp.eq.s32.totalorder %v34, %v984
  %vm1037 = vcmp.eq.s32.totalorder %v34, %v987
  %vm1038 = vcmp.eq.s32.totalorder %v34, %v990
  %vm1039 = vcmp.eq.s32.totalorder %v34, %v993
  %vm1040 = vcmp.eq.s32.totalorder %v34, %v996
  %vm1041 = vcmp.eq.s32.totalorder %v34, %v999
  %vm1042 = vcmp.eq.s32.totalorder %v34, %v1002
  %vm1043 = vcmp.eq.s32.totalorder %v34, %v1005
  %vm1044 = vcmp.eq.s32.totalorder %v34, %v1008
  %vm1045 = vcmp.eq.s32.totalorder %v34, %v1011
  %vm1046 = vmor %vm842, %vm1012
  %vm1047 = vmor %vm843, %vm1013
  %vm1048 = vmor %vm844, %vm1014
  %vm1049 = vmor %vm845, %vm1015
  %vm1050 = vmor %vm846, %vm1016
  %vm1051 = vmor %vm847, %vm1017
  %vm1052 = vmor %vm848, %vm1018
  %vm1053 = vmor %vm849, %vm1019
  %vm1054 = vmor %vm850, %vm1020
  %vm1055 = vmor %vm851, %vm1021
  %vm1056 = vmor %vm852, %vm1022
  %vm1057 = vmor %vm853, %vm1023
  %vm1058 = vmor %vm854, %vm1024
  %vm1059 = vmor %vm855, %vm1025
  %vm1060 = vmor %vm856, %vm1026
  %vm1061 = vmor %vm857, %vm1027
  %vm1062 = vmor %vm858, %vm1028
  %vm1063 = vmor %vm859, %vm1029
  %vm1064 = vmor %vm860, %vm1030
  %vm1065 = vmor %vm861, %vm1031
  %vm1066 = vmor %vm862, %vm1032
  %vm1067 = vmor %vm863, %vm1033
  %vm1068 = vmor %vm864, %vm1034
  %vm1069 = vmor %vm865, %vm1035
  %vm1070 = vmor %vm866, %vm1036
  %vm1071 = vmor %vm867, %vm1037
  %vm1072 = vmor %vm868, %vm1038
  %vm1073 = vmor %vm869, %vm1039
  %vm1074 = vmor %vm870, %vm1040
  %vm1075 = vmor %vm871, %vm1041
  %vm1076 = vmor %vm872, %vm1042
  %vm1077 = vmor %vm873, %vm1043
  %vm1078 = vmor %vm874, %vm1044
  %vm1079 = vmor %vm875, %vm1045
  %v1080 = vadd.s32 %v502, 63
  %v1081 = vadd.s32 %v503, 63
  %v1082 = vadd.s32 %v504, 63
  %v1083 = vadd.s32 %v505, 63
  %v1084 = vadd.s32 %v506, 63
  %v1085 = vadd.s32 %v507, 63
  %v1086 = vadd.s32 %v508, 63
  %v1087 = vadd.s32 %v509, 63
  %v1088 = vadd.s32 %v510, 63
  %v1089 = vadd.s32 %v511, 63
  %v1090 = vadd.s32 %v512, 63
  %v1091 = vadd.s32 %v513, 63
  %v1092 = vadd.s32 %v514, 63
  %v1093 = vadd.s32 %v515, 63
  %v1094 = vadd.s32 %v516, 63
  %v1095 = vadd.s32 %v517, 63
  %v1096 = vadd.s32 %v518, 63
  %v1097 = vadd.s32 %v519, 63
  %v1098 = vadd.s32 %v520, 63
  %v1099 = vadd.s32 %v521, 63
  %v1100 = vadd.s32 %v522, 63
  %v1101 = vadd.s32 %v523, 63
  %v1102 = vadd.s32 %v524, 63
  %v1103 = vadd.s32 %v525, 63
  %v1104 = vadd.s32 %v526, 63
  %v1105 = vadd.s32 %v527, 63
  %v1106 = vadd.s32 %v528, 63
  %v1107 = vadd.s32 %v529, 63
  %v1108 = vadd.s32 %v530, 63
  %v1109 = vadd.s32 %v531, 63
  %v1110 = vadd.s32 %v532, 63
  %v1111 = vadd.s32 %v533, 63
  %v1112 = vadd.s32 %v534, 63
  %v1113 = vadd.s32 %v535, 63
  %1114 = vset.pattern.permute.xlu0 3
  %1115 = vperm.xlu0 %1114, %v1080
  %v1116 = vpop.permute.xlu0 %1115
  %1117 = vset.pattern.permute.xlu0 3
  %1118 = vperm.xlu0 %1117, %v1081
  %v1119 = vpop.permute.xlu0 %1118
  %1120 = vset.pattern.permute.xlu0 3
  %1121 = vperm.xlu0 %1120, %v1082
  %v1122 = vpop.permute.xlu0 %1121
  %1123 = vset.pattern.permute.xlu0 3
  %1124 = vperm.xlu0 %1123, %v1083
  %v1125 = vpop.permute.xlu0 %1124
  %1126 = vset.pattern.permute.xlu0 3
  %1127 = vperm.xlu0 %1126, %v1084
  %v1128 = vpop.permute.xlu0 %1127
  %1129 = vset.pattern.permute.xlu0 3
  %1130 = vperm.xlu0 %1129, %v1085
  %v1131 = vpop.permute.xlu0 %1130
  %1132 = vset.pattern.permute.xlu0 3
  %1133 = vperm.xlu0 %1132, %v1086
  %v1134 = vpop.permute.xlu0 %1133
  %1135 = vset.pattern.permute.xlu0 3
  %1136 = vperm.xlu0 %1135, %v1087
  %v1137 = vpop.permute.xlu0 %1136
  %1138 = vset.pattern.permute.xlu0 3
  %1139 = vperm.xlu0 %1138, %v1088
  %v1140 = vpop.permute.xlu0 %1139
  %1141 = vset.pattern.permute.xlu0 3
  %1142 = vperm.xlu0 %1141, %v1089
  %v1143 = vpop.permute.xlu0 %1142
  %1144 = vset.pattern.permute.xlu0 3
  %1145 = vperm.xlu0 %1144, %v1090
  %v1146 = vpop.permute.xlu0 %1145
  %1147 = vset.pattern.permute.xlu0 3
  %1148 = vperm.xlu0 %1147, %v1091
  %v1149 = vpop.permute.xlu0 %1148
  %1150 = vset.pattern.permute.xlu0 3
  %1151 = vperm.xlu0 %1150, %v1092
  %v1152 = vpop.permute.xlu0 %1151
  %1153 = vset.pattern.permute.xlu0 3
  %1154 = vperm.xlu0 %1153, %v1093
  %v1155 = vpop.permute.xlu0 %1154
  %1156 = vset.pattern.permute.xlu0 3
  %1157 = vperm.xlu0 %1156, %v1094
  %v1158 = vpop.permute.xlu0 %1157
  %1159 = vset.pattern.permute.xlu0 3
  %1160 = vperm.xlu0 %1159, %v1095
  %v1161 = vpop.permute.xlu0 %1160
  %1162 = vset.pattern.permute.xlu0 3
  %1163 = vperm.xlu0 %1162, %v1096
  %v1164 = vpop.permute.xlu0 %1163
  %1165 = vset.pattern.permute.xlu0 3
  %1166 = vperm.xlu0 %1165, %v1097
  %v1167 = vpop.permute.xlu0 %1166
  %1168 = vset.pattern.permute.xlu0 3
  %1169 = vperm.xlu0 %1168, %v1098
  %v1170 = vpop.permute.xlu0 %1169
  %1171 = vset.pattern.permute.xlu0 3
  %1172 = vperm.xlu0 %1171, %v1099
  %v1173 = vpop.permute.xlu0 %1172
  %1174 = vset.pattern.permute.xlu0 3
  %1175 = vperm.xlu0 %1174, %v1100
  %v1176 = vpop.permute.xlu0 %1175
  %1177 = vset.pattern.permute.xlu0 3
  %1178 = vperm.xlu0 %1177, %v1101
  %v1179 = vpop.permute.xlu0 %1178
  %1180 = vset.pattern.permute.xlu0 3
  %1181 = vperm.xlu0 %1180, %v1102
  %v1182 = vpop.permute.xlu0 %1181
  %1183 = vset.pattern.permute.xlu0 3
  %1184 = vperm.xlu0 %1183, %v1103
  %v1185 = vpop.permute.xlu0 %1184
  %1186 = vset.pattern.permute.xlu0 3
  %1187 = vperm.xlu0 %1186, %v1104
  %v1188 = vpop.permute.xlu0 %1187
  %1189 = vset.pattern.permute.xlu0 3
  %1190 = vperm.xlu0 %1189, %v1105
  %v1191 = vpop.permute.xlu0 %1190
  %1192 = vset.pattern.permute.xlu0 3
  %1193 = vperm.xlu0 %1192, %v1106
  %v1194 = vpop.permute.xlu0 %1193
  %1195 = vset.pattern.permute.xlu0 3
  %1196 = vperm.xlu0 %1195, %v1107
  %v1197 = vpop.permute.xlu0 %1196
  %1198 = vset.pattern.permute.xlu0 3
  %1199 = vperm.xlu0 %1198, %v1108
  %v1200 = vpop.permute.xlu0 %1199
  %1201 = vset.pattern.permute.xlu0 3
  %1202 = vperm.xlu0 %1201, %v1109
  %v1203 = vpop.permute.xlu0 %1202
  %1204 = vset.pattern.permute.xlu0 3
  %1205 = vperm.xlu0 %1204, %v1110
  %v1206 = vpop.permute.xlu0 %1205
  %1207 = vset.pattern.permute.xlu0 3
  %1208 = vperm.xlu0 %1207, %v1111
  %v1209 = vpop.permute.xlu0 %1208
  %1210 = vset.pattern.permute.xlu0 3
  %1211 = vperm.xlu0 %1210, %v1112
  %v1212 = vpop.permute.xlu0 %1211
  %1213 = vset.pattern.permute.xlu0 3
  %1214 = vperm.xlu0 %1213, %v1113
  %v1215 = vpop.permute.xlu0 %1214
  %vm1216 = vcmp.eq.s32.totalorder %v34, %v1116
  %vm1217 = vcmp.eq.s32.totalorder %v34, %v1119
  %vm1218 = vcmp.eq.s32.totalorder %v34, %v1122
  %vm1219 = vcmp.eq.s32.totalorder %v34, %v1125
  %vm1220 = vcmp.eq.s32.totalorder %v34, %v1128
  %vm1221 = vcmp.eq.s32.totalorder %v34, %v1131
  %vm1222 = vcmp.eq.s32.totalorder %v34, %v1134
  %vm1223 = vcmp.eq.s32.totalorder %v34, %v1137
  %vm1224 = vcmp.eq.s32.totalorder %v34, %v1140
  %vm1225 = vcmp.eq.s32.totalorder %v34, %v1143
  %vm1226 = vcmp.eq.s32.totalorder %v34, %v1146
  %vm1227 = vcmp.eq.s32.totalorder %v34, %v1149
  %vm1228 = vcmp.eq.s32.totalorder %v34, %v1152
  %vm1229 = vcmp.eq.s32.totalorder %v34, %v1155
  %vm1230 = vcmp.eq.s32.totalorder %v34, %v1158
  %vm1231 = vcmp.eq.s32.totalorder %v34, %v1161
  %vm1232 = vcmp.eq.s32.totalorder %v34, %v1164
  %vm1233 = vcmp.eq.s32.totalorder %v34, %v1167
  %vm1234 = vcmp.eq.s32.totalorder %v34, %v1170
  %vm1235 = vcmp.eq.s32.totalorder %v34, %v1173
  %vm1236 = vcmp.eq.s32.totalorder %v34, %v1176
  %vm1237 = vcmp.eq.s32.totalorder %v34, %v1179
  %vm1238 = vcmp.eq.s32.totalorder %v34, %v1182
  %vm1239 = vcmp.eq.s32.totalorder %v34, %v1185
  %vm1240 = vcmp.eq.s32.totalorder %v34, %v1188
  %vm1241 = vcmp.eq.s32.totalorder %v34, %v1191
  %vm1242 = vcmp.eq.s32.totalorder %v34, %v1194
  %vm1243 = vcmp.eq.s32.totalorder %v34, %v1197
  %vm1244 = vcmp.eq.s32.totalorder %v34, %v1200
  %vm1245 = vcmp.eq.s32.totalorder %v34, %v1203
  %vm1246 = vcmp.eq.s32.totalorder %v34, %v1206
  %vm1247 = vcmp.eq.s32.totalorder %v34, %v1209
  %vm1248 = vcmp.eq.s32.totalorder %v34, %v1212
  %vm1249 = vcmp.eq.s32.totalorder %v34, %v1215
  %vm1250 = vmor %vm1046, %vm1216
  %vm1251 = vmor %vm1047, %vm1217
  %vm1252 = vmor %vm1048, %vm1218
  %vm1253 = vmor %vm1049, %vm1219
  %vm1254 = vmor %vm1050, %vm1220
  %vm1255 = vmor %vm1051, %vm1221
  %vm1256 = vmor %vm1052, %vm1222
  %vm1257 = vmor %vm1053, %vm1223
  %vm1258 = vmor %vm1054, %vm1224
  %vm1259 = vmor %vm1055, %vm1225
  %vm1260 = vmor %vm1056, %vm1226
  %vm1261 = vmor %vm1057, %vm1227
  %vm1262 = vmor %vm1058, %vm1228
  %vm1263 = vmor %vm1059, %vm1229
  %vm1264 = vmor %vm1060, %vm1230
  %vm1265 = vmor %vm1061, %vm1231
  %vm1266 = vmor %vm1062, %vm1232
  %vm1267 = vmor %vm1063, %vm1233
  %vm1268 = vmor %vm1064, %vm1234
  %vm1269 = vmor %vm1065, %vm1235
  %vm1270 = vmor %vm1066, %vm1236
  %vm1271 = vmor %vm1067, %vm1237
  %vm1272 = vmor %vm1068, %vm1238
  %vm1273 = vmor %vm1069, %vm1239
  %vm1274 = vmor %vm1070, %vm1240
  %vm1275 = vmor %vm1071, %vm1241
  %vm1276 = vmor %vm1072, %vm1242
  %vm1277 = vmor %vm1073, %vm1243
  %vm1278 = vmor %vm1074, %vm1244
  %vm1279 = vmor %vm1075, %vm1245
  %vm1280 = vmor %vm1076, %vm1246
  %vm1281 = vmor %vm1077, %vm1247
  %vm1282 = vmor %vm1078, %vm1248
  %vm1283 = vmor %vm1079, %vm1249
  %v1284 = vsel %vm1250, 1, 0
  %v1285 = vsel %vm1251, 1, 0
  %v1286 = vsel %vm1252, 1, 0
  %v1287 = vsel %vm1253, 1, 0
  %v1288 = vsel %vm1254, 1, 0
  %v1289 = vsel %vm1255, 1, 0
  %v1290 = vsel %vm1256, 1, 0
  %v1291 = vsel %vm1257, 1, 0
  %v1292 = vsel %vm1258, 1, 0
  %v1293 = vsel %vm1259, 1, 0
  %v1294 = vsel %vm1260, 1, 0
  %v1295 = vsel %vm1261, 1, 0
  %v1296 = vsel %vm1262, 1, 0
  %v1297 = vsel %vm1263, 1, 0
  %v1298 = vsel %vm1264, 1, 0
  %v1299 = vsel %vm1265, 1, 0
  %v1300 = vsel %vm1266, 1, 0
  %v1301 = vsel %vm1267, 1, 0
  %v1302 = vsel %vm1268, 1, 0
  %v1303 = vsel %vm1269, 1, 0
  %v1304 = vsel %vm1270, 1, 0
  %v1305 = vsel %vm1271, 1, 0
  %v1306 = vsel %vm1272, 1, 0
  %v1307 = vsel %vm1273, 1, 0
  %v1308 = vsel %vm1274, 1, 0
  %v1309 = vsel %vm1275, 1, 0
  %v1310 = vsel %vm1276, 1, 0
  %v1311 = vsel %vm1277, 1, 0
  %v1312 = vsel %vm1278, 1, 0
  %v1313 = vsel %vm1279, 1, 0
  %v1314 = vsel %vm1280, 1, 0
  %v1315 = vsel %vm1281, 1, 0
  %v1316 = vsel %vm1282, 1, 0
  %v1317 = vsel %vm1283, 1, 0
  %v1318 = vcvt.s32.f32 %v1284
  %v1319 = vcvt.s32.f32 %v1285
  %v1320 = vcvt.s32.f32 %v1286
  %v1321 = vcvt.s32.f32 %v1287
  %v1322 = vcvt.s32.f32 %v1288
  %v1323 = vcvt.s32.f32 %v1289
  %v1324 = vcvt.s32.f32 %v1290
  %v1325 = vcvt.s32.f32 %v1291
  %v1326 = vcvt.s32.f32 %v1292
  %v1327 = vcvt.s32.f32 %v1293
  %v1328 = vcvt.s32.f32 %v1294
  %v1329 = vcvt.s32.f32 %v1295
  %v1330 = vcvt.s32.f32 %v1296
  %v1331 = vcvt.s32.f32 %v1297
  %v1332 = vcvt.s32.f32 %v1298
  %v1333 = vcvt.s32.f32 %v1299
  %v1334 = vcvt.s32.f32 %v1300
  %v1335 = vcvt.s32.f32 %v1301
  %v1336 = vcvt.s32.f32 %v1302
  %v1337 = vcvt.s32.f32 %v1303
  %v1338 = vcvt.s32.f32 %v1304
  %v1339 = vcvt.s32.f32 %v1305
  %v1340 = vcvt.s32.f32 %v1306
  %v1341 = vcvt.s32.f32 %v1307
  %v1342 = vcvt.s32.f32 %v1308
  %v1343 = vcvt.s32.f32 %v1309
  %v1344 = vcvt.s32.f32 %v1310
  %v1345 = vcvt.s32.f32 %v1311
  %v1346 = vcvt.s32.f32 %v1312
  %v1347 = vcvt.s32.f32 %v1313
  %v1348 = vcvt.s32.f32 %v1314
  %v1349 = vcvt.s32.f32 %v1315
  %v1350 = vcvt.s32.f32 %v1316
  %v1351 = vcvt.s32.f32 %v1317
  %v1352 = vld [vmem:[%s3] sm:$0xff]
  %v1353 = vld [vmem:[%s3 + $0x8] sm:$0xff]
  %v1354 = vld [vmem:[%s3 + $0x10] sm:$0xff]
  %v1355 = vld [vmem:[%s3 + $0x18] sm:$0xff]
  %v1356 = vld [vmem:[%s3 + $0x20] sm:$0xff]
  %v1357 = vld [vmem:[%s3 + $0x28] sm:$0xff]
  %v1358 = vld [vmem:[%s3 + $0x30] sm:$0xff]
  %v1359 = vld [vmem:[%s3 + $0x38] sm:$0xff]
  %v1360 = vld [vmem:[%s3 + $0x40] sm:$0xff]
  %v1361 = vld [vmem:[%s3 + $0x48] sm:$0xff]
  %v1362 = vld [vmem:[%s3 + $0x50] sm:$0xf]
  %v1364 = vsel %vm382, %v1318, 0
  %v1367 = vsel %vm382, %v1319, 0
  %v1370 = vsel %vm382, %v1320, 0
  %v1373 = vsel %vm382, %v1321, 0
  %v1376 = vsel %vm382, %v1322, 0
  %v1379 = vsel %vm382, %v1323, 0
  %v1382 = vsel %vm382, %v1324, 0
  %v1385 = vsel %vm382, %v1325, 0
  %v1388 = vsel %vm382, %v1326, 0
  %v1391 = vsel %vm382, %v1327, 0
  %v1394 = vsel %vm382, %v1328, 0
  %v1397 = vsel %vm382, %v1329, 0
  %v1400 = vsel %vm382, %v1330, 0
  %v1403 = vsel %vm382, %v1331, 0
  %v1406 = vsel %vm382, %v1332, 0
  %v1409 = vsel %vm382, %v1333, 0
  %v1412 = vsel %vm382, %v1334, 0
  %v1415 = vsel %vm382, %v1335, 0
  %v1418 = vsel %vm382, %v1336, 0
  %v1421 = vsel %vm382, %v1337, 0
  %v1424 = vsel %vm382, %v1338, 0
  %v1427 = vsel %vm382, %v1339, 0
  %v1430 = vsel %vm382, %v1340, 0
  %v1433 = vsel %vm382, %v1341, 0
  %v1436 = vsel %vm382, %v1342, 0
  %v1439 = vsel %vm382, %v1343, 0
  %v1442 = vsel %vm382, %v1344, 0
  %v1445 = vsel %vm382, %v1345, 0
  %v1448 = vsel %vm382, %v1346, 0
  %v1451 = vsel %vm382, %v1347, 0
  %v1454 = vsel %vm382, %v1348, 0
  %v1457 = vsel %vm382, %v1349, 0
  %v1460 = vsel %vm382, %v1350, 0
  %v1463 = vsel %vm382, %v1351, 0
  %v1466 = vsel %vm425, %v1362, 0
  %1468 = vmatpush.msra.mxu0 0.0
  %1469 = vmatpush.msra.mxu0 0.0
  %1470 = vmatpush.msra.mxu0 0.0
  %1471 = vmatpush.msra.mxu0 0.0
  %1472 = vmatpush.msra.mxu0 0.0
  %1473 = vmatpush.msra.mxu0 %v1466
  %1474 = vmatpush.msra.mxu0 %v1361
  %1475 = vmatpush.msra.mxu0 %v1360
  %1476 = vmatpush.msra.mxu0 %v1359
  %1477 = vmatpush.msra.mxu0 %v1358
  %1478 = vmatpush.msra.mxu0 %v1357
  %1479 = vmatpush.msra.mxu0 %v1356
  %1480 = vmatpush.msra.mxu0 %v1355
  %1481 = vmatpush.msra.mxu0 %v1354
  %1482 = vmatpush.msra.mxu0 %v1353
  %1483 = vmatpush.msra.mxu0 %v1352
  %1484 = vmatmul.f32.gmra.mxu0 %v1364
  %v1485 = vpop.f32.mrf.mxu0
  %v1486 = vadd.f32 0.0, %v1485
  %1487 = vmatmul.f32.gmra.mxu0 %v1367
  %v1488 = vpop.f32.mrf.mxu0
  %v1489 = vadd.f32 0.0, %v1488
  %1490 = vmatmul.f32.gmra.mxu0 %v1370
  %v1491 = vpop.f32.mrf.mxu0
  %v1492 = vadd.f32 0.0, %v1491
  %1493 = vmatmul.f32.gmra.mxu0 %v1373
  %v1494 = vpop.f32.mrf.mxu0
  %v1495 = vadd.f32 0.0, %v1494
  %1496 = vmatmul.f32.gmra.mxu0 %v1376
  %v1497 = vpop.f32.mrf.mxu0
  %v1498 = vadd.f32 0.0, %v1497
  %1499 = vmatmul.f32.gmra.mxu0 %v1379
  %v1500 = vpop.f32.mrf.mxu0
  %v1501 = vadd.f32 0.0, %v1500
  %1502 = vmatmul.f32.gmra.mxu0 %v1382
  %v1503 = vpop.f32.mrf.mxu0
  %v1504 = vadd.f32 0.0, %v1503
  %1505 = vmatmul.f32.gmra.mxu0 %v1385
  %v1506 = vpop.f32.mrf.mxu0
  %v1507 = vadd.f32 0.0, %v1506
  %1508 = vmatmul.f32.gmra.mxu0 %v1388
  %v1509 = vpop.f32.mrf.mxu0
  %v1510 = vadd.f32 0.0, %v1509
  %1511 = vmatmul.f32.gmra.mxu0 %v1391
  %v1512 = vpop.f32.mrf.mxu0
  %v1513 = vadd.f32 0.0, %v1512
  %1514 = vmatmul.f32.gmra.mxu0 %v1394
  %v1515 = vpop.f32.mrf.mxu0
  %v1516 = vadd.f32 0.0, %v1515
  %1517 = vmatmul.f32.gmra.mxu0 %v1397
  %v1518 = vpop.f32.mrf.mxu0
  %v1519 = vadd.f32 0.0, %v1518
  %1520 = vmatmul.f32.gmra.mxu0 %v1400
  %v1521 = vpop.f32.mrf.mxu0
  %v1522 = vadd.f32 0.0, %v1521
  %1523 = vmatmul.f32.gmra.mxu0 %v1403
  %v1524 = vpop.f32.mrf.mxu0
  %v1525 = vadd.f32 0.0, %v1524
  %1526 = vmatmul.f32.gmra.mxu0 %v1406
  %v1527 = vpop.f32.mrf.mxu0
  %v1528 = vadd.f32 0.0, %v1527
  %1529 = vmatmul.f32.gmra.mxu0 %v1409
  %v1530 = vpop.f32.mrf.mxu0
  %v1531 = vadd.f32 0.0, %v1530
  %1532 = vmatmul.f32.gmra.mxu0 %v1412
  %v1533 = vpop.f32.mrf.mxu0
  %v1534 = vadd.f32 0.0, %v1533
  %1535 = vmatmul.f32.gmra.mxu0 %v1415
  %v1536 = vpop.f32.mrf.mxu0
  %v1537 = vadd.f32 0.0, %v1536
  %1538 = vmatmul.f32.gmra.mxu0 %v1418
  %v1539 = vpop.f32.mrf.mxu0
  %v1540 = vadd.f32 0.0, %v1539
  %1541 = vmatmul.f32.gmra.mxu0 %v1421
  %v1542 = vpop.f32.mrf.mxu0
  %v1543 = vadd.f32 0.0, %v1542
  %1544 = vmatmul.f32.gmra.mxu0 %v1424
  %v1545 = vpop.f32.mrf.mxu0
  %v1546 = vadd.f32 0.0, %v1545
  %1547 = vmatmul.f32.gmra.mxu0 %v1427
  %v1548 = vpop.f32.mrf.mxu0
  %v1549 = vadd.f32 0.0, %v1548
  %1550 = vmatmul.f32.gmra.mxu0 %v1430
  %v1551 = vpop.f32.mrf.mxu0
  %v1552 = vadd.f32 0.0, %v1551
  %1553 = vmatmul.f32.gmra.mxu0 %v1433
  %v1554 = vpop.f32.mrf.mxu0
  %v1555 = vadd.f32 0.0, %v1554
  %1556 = vmatmul.f32.gmra.mxu0 %v1436
  %v1557 = vpop.f32.mrf.mxu0
  %v1558 = vadd.f32 0.0, %v1557
  %1559 = vmatmul.f32.gmra.mxu0 %v1439
  %v1560 = vpop.f32.mrf.mxu0
  %v1561 = vadd.f32 0.0, %v1560
  %1562 = vmatmul.f32.gmra.mxu0 %v1442
  %v1563 = vpop.f32.mrf.mxu0
  %v1564 = vadd.f32 0.0, %v1563
  %1565 = vmatmul.f32.gmra.mxu0 %v1445
  %v1566 = vpop.f32.mrf.mxu0
  %v1567 = vadd.f32 0.0, %v1566
  %1568 = vmatmul.f32.gmra.mxu0 %v1448
  %v1569 = vpop.f32.mrf.mxu0
  %v1570 = vadd.f32 0.0, %v1569
  %1571 = vmatmul.f32.gmra.mxu0 %v1451
  %v1572 = vpop.f32.mrf.mxu0
  %v1573 = vadd.f32 0.0, %v1572
  %1574 = vmatmul.f32.gmra.mxu0 %v1454
  %v1575 = vpop.f32.mrf.mxu0
  %v1576 = vadd.f32 0.0, %v1575
  %1577 = vmatmul.f32.gmra.mxu0 %v1457
  %v1578 = vpop.f32.mrf.mxu0
  %v1579 = vadd.f32 0.0, %v1578
  %1580 = vmatmul.f32.gmra.mxu0 %v1460
  %v1581 = vpop.f32.mrf.mxu0
  %v1582 = vadd.f32 0.0, %v1581
  %1583 = vmatmul.f32.gmra.mxu0 %v1463
  %v1584 = vpop.f32.mrf.mxu0
  %v1585 = vadd.f32 0.0, %v1584
  %1586 = vdwg.mxu0
  %1587 = vst [vmem:[%s5] sm:$0xff] %v1486
  %1588 = vst [vmem:[%s5 + $0x8] sm:$0xff] %v1489
  %1589 = vst [vmem:[%s5 + $0x10] sm:$0xff] %v1492
  %1590 = vst [vmem:[%s5 + $0x18] sm:$0xff] %v1495
  %1591 = vst [vmem:[%s5 + $0x20] sm:$0xff] %v1498
  %1592 = vst [vmem:[%s5 + $0x28] sm:$0xff] %v1501
  %1593 = vst [vmem:[%s5 + $0x30] sm:$0xff] %v1504
  %1594 = vst [vmem:[%s5 + $0x38] sm:$0xff] %v1507
  %1595 = vst [vmem:[%s5 + $0x40] sm:$0xff] %v1510
  %1596 = vst [vmem:[%s5 + $0x48] sm:$0xff] %v1513
  %1597 = vst [vmem:[%s5 + $0x50] sm:$0xff] %v1516
  %1598 = vst [vmem:[%s5 + $0x58] sm:$0xff] %v1519
  %1599 = vst [vmem:[%s5 + $0x60] sm:$0xff] %v1522
  %1600 = vst [vmem:[%s5 + $0x68] sm:$0xff] %v1525
  %1601 = vst [vmem:[%s5 + $0x70] sm:$0xff] %v1528
  %1602 = vst [vmem:[%s5 + $0x78] sm:$0xff] %v1531
  %1603 = vst [vmem:[%s5 + $0x80] sm:$0xff] %v1534
  %1604 = vst [vmem:[%s5 + $0x88] sm:$0xff] %v1537
  %1605 = vst [vmem:[%s5 + $0x90] sm:$0xff] %v1540
  %1606 = vst [vmem:[%s5 + $0x98] sm:$0xff] %v1543
  %1607 = vst [vmem:[%s5 + $0xa0] sm:$0xff] %v1546
  %1608 = vst [vmem:[%s5 + $0xa8] sm:$0xff] %v1549
  %1609 = vst [vmem:[%s5 + $0xb0] sm:$0xff] %v1552
  %1610 = vst [vmem:[%s5 + $0xb8] sm:$0xff] %v1555
  %1611 = vst [vmem:[%s5 + $0xc0] sm:$0xff] %v1558
  %1612 = vst [vmem:[%s5 + $0xc8] sm:$0xff] %v1561
  %1613 = vst [vmem:[%s5 + $0xd0] sm:$0xff] %v1564
  %1614 = vst [vmem:[%s5 + $0xd8] sm:$0xff] %v1567
  %1615 = vst [vmem:[%s5 + $0xe0] sm:$0xff] %v1570
  %1616 = vst [vmem:[%s5 + $0xe8] sm:$0xff] %v1573
  %1617 = vst [vmem:[%s5 + $0xf0] sm:$0xff] %v1576
  %1618 = vst [vmem:[%s5 + $0xf8] sm:$0xff] %v1579
  %1619 = vst [vmem:[%s5 + $0x100] sm:$0xff] %v1582
  %1620 = vst [vmem:[%s5 + $0x108] sm:$0xff] %v1585
  // Predicated region
  $region18: #{network_forward.1} parent=0 // pred_check
    _
  $region19: #{network_forward.1} parent=0 // pred_check_branch
    %1622 = sbr.rel (0) target = $region21
  $region20: #{network_forward.1} parent=0 // pred_region
    _
  $region21: #{network_forward.1} parent=0 // pred_fallthru
    _
  // Predicated region
  $region22: #{network_forward.1} parent=0 // pred_check
    _
  $region23: #{network_forward.1} parent=0 // pred_check_branch
    %1624 = sbr.rel (0) target = $region25
  $region24: #{network_forward.1} parent=0 // pred_region
    _
  $region25: #{network_forward.1} parent=0 // pred_fallthru
    _
  // Predicated region
  $region26: #{network_forward.1} parent=0 // pred_check
    _
  $region27: #{network_forward.1} parent=0 // pred_check_branch
    %1626 = sbr.rel (0) target = $region29
  $region28: #{network_forward.1} parent=0 // pred_region
    _
  $region29: #{network_forward.1} parent=0 // pred_fallthru
    _
  // Predicated region
  $region30: #{network_forward.1} parent=0 // pred_check
    _
  $region31: #{network_forward.1} parent=0 // pred_check_branch
    %1628 = sbr.rel (0) target = $region33
  $region32: #{network_forward.1} parent=0 // pred_region
    _
  $region33: #{network_forward.1} parent=0 // pred_fallthru
    _

</llo_original>
